<compile_context>
chip_gen: v5e
topology: v5e:2x2
jax: 0.10.0
libtpu: 0.0.40
codegen_flags: <defaults>
</compile_context>

<pallas_src>
import jax
import jax.numpy as jnp
from jax.experimental import pallas as pl
from jax.experimental.pallas import tpu as pltpu

# Layer dims from the PyTorch module (num_input_params chosen small & synthetic).
NUM_INPUT_PARAMS = 16
LAYER_DIMS = [NUM_INPUT_PARAMS, 200, 200, 150, 100, 50, 50, 10, 1]
N_LAYERS = len(LAYER_DIMS) - 1  # 8 Linear layers


def _round_up(x, m):
    return (x + m - 1) // m * m


# Input keeps its true width (K=16 is fine for the MXU); every layer *output* is
# padded to a multiple of 128 so all lanes are unmasked and the final store is
# lane-dense.
PADDED_DIMS = [NUM_INPUT_PARAMS] + [_round_up(d, 128) for d in LAYER_DIMS[1:]]


def _mlp_kernel(x_ref, *refs):
    """refs = (w1, b1, w2, b2, ..., w8, b8, o_ref); weights are (din_pad, dout_pad)."""
    o_ref = refs[-1]
    param_refs = refs[:-1]

    # TODO(synk): nn.Dropout(0.5) is implemented as identity (eval/inference mode).
    h = x_ref[...]                                     # (tile, 16) f32
    for layer in range(N_LAYERS):
        w = param_refs[2 * layer][...]                 # (din_pad, dout_pad) param dtype
        b = param_refs[2 * layer + 1][...]             # (1, dout_pad) f32, broadcasts
        h = jnp.dot(h.astype(w.dtype), w, preferred_element_type=jnp.float32) + b
        if layer < N_LAYERS - 1:
            h = jnp.maximum(h, 0.0)                    # ReLU on hidden layers
        else:
            h = jax.nn.sigmoid(h)                      # sigmoid on the (padded) output
    o_ref[...] = h.astype(o_ref.dtype)                 # lane-dense (tile, 128) store


def _pad_params(params, param_dtype):
    """Zero-pad (din, dout) weights / (1, dout) biases to the 128-multiple widths."""
    padded = []
    for layer in range(N_LAYERS):
        w, b = params[2 * layer], params[2 * layer + 1]
        din, dout = LAYER_DIMS[layer], LAYER_DIMS[layer + 1]
        dip, dop = PADDED_DIMS[layer], PADDED_DIMS[layer + 1]
        w = jnp.pad(w, ((0, dip - din), (0, dop - dout))).astype(param_dtype)
        b = jnp.pad(jnp.reshape(b, (1, dout)), ((0, 0), (0, dop - dout)))
        padded += [w, b.astype(jnp.float32)]           # bias stays f32 (added post-MXU)
    return padded


def mlp_forward(x, params, *, batch_tile=512, param_dtype=jnp.float32):
    """x: (B, NUM_INPUT_PARAMS) f32. params: flat list [w1, b1, ..., w8, b8]."""
    B, D_in = x.shape
    assert D_in == NUM_INPUT_PARAMS

    # Tile must be a multiple of 8 (sublanes) and no bigger than the padded batch.
    batch_tile = max(8, (min(int(batch_tile), _round_up(B, 8)) // 8) * 8)
    B_pad = _round_up(B, batch_tile)
    if B_pad != B:
        x = jnp.pad(x, ((0, B_pad - B), (0, 0)))

    padded_params = _pad_params(params, param_dtype)

    grid = (B_pad // batch_tile,)

    in_specs = [pl.BlockSpec((batch_tile, D_in), lambda i: (i, 0))]
    for layer in range(N_LAYERS):
        dip, dop = PADDED_DIMS[layer], PADDED_DIMS[layer + 1]
        # Full-array, grid-invariant blocks: DMA'd once, replicated across batch tiles.
        in_specs.append(pl.BlockSpec((dip, dop), lambda i: (0, 0)))
        in_specs.append(pl.BlockSpec((1, dop), lambda i: (0, 0)))

    out_dim = PADDED_DIMS[-1]                          # 128 -> unmasked lane-dense store
    out_spec = pl.BlockSpec((batch_tile, out_dim), lambda i: (i, 0))

    flops = 2 * B_pad * sum(PADDED_DIMS[l] * PADDED_DIMS[l + 1] for l in range(N_LAYERS))
    bytes_accessed = (
        x.size * x.dtype.itemsize
        + sum(p.size * p.dtype.itemsize for p in padded_params)
        + B_pad * out_dim * 4
    )
    cost = pl.CostEstimate(
        flops=int(flops),
        transcendentals=int(B_pad * out_dim),          # sigmoid exp on the last layer
        bytes_accessed=int(bytes_accessed),
    )

    out = pl.pallas_call(
        _mlp_kernel,
        out_shape=jax.ShapeDtypeStruct((B_pad, out_dim), jnp.float32),
        grid_spec=pltpu.PrefetchScalarGridSpec(
            num_scalar_prefetch=0,
            grid=grid,
            in_specs=in_specs,
            out_specs=out_spec,
        ),
        compiler_params=pltpu.CompilerParams(
            dimension_semantics=("parallel",),
        ),
        cost_estimate=cost,
    )(x, *padded_params)

    # Drop batch padding and the padded output columns (real output is column 0).
    return out[:B, :1]


def init_params(key):
    """PyTorch-style Linear init: U(-1/sqrt(fan_in), 1/sqrt(fan_in)), (din, dout) layout."""
    params = []
    for layer in range(N_LAYERS):
        din, dout = LAYER_DIMS[layer], LAYER_DIMS[layer + 1]
        key, kw, kb = jax.random.split(key, 3)
        bound = 1.0 / jnp.sqrt(jnp.float32(din))
        w = jax.random.uniform(kw, (din, dout), jnp.float32, -bound, bound)
        b = jax.random.uniform(kb, (1, dout), jnp.float32, -bound, bound)
        params += [w, b]
    return params


def reference_forward(x, params):
    """Plain-JAX reference of the same forward pass (dropout = identity)."""
    h = x
    for layer in range(N_LAYERS):
        w, b = params[2 * layer], params[2 * layer + 1]
        h = h @ w + b
        h = jnp.maximum(h, 0.0) if layer < N_LAYERS - 1 else jax.nn.sigmoid(h)
    return h


if __name__ == "__main__":
    key = jax.random.PRNGKey(0)
    key, kx = jax.random.split(key)

    B = 256
    x = jax.random.normal(kx, (B, NUM_INPUT_PARAMS), jnp.float32)
    params = init_params(key)
    ref = reference_forward(x, params)

    # f32 path (works on every generation); tile 128 -> 2 grid steps so v7x's two
    # TensorCores both get work via dimension_semantics=("parallel",).
    out = jax.block_until_ready(mlp_forward(x, params, batch_tile=128,
                                            param_dtype=jnp.float32))
    assert out.shape == (B, 1)
    assert jnp.allclose(out, ref, atol=1e-4, rtol=1e-4)

    # bf16-weight path (v6e/v7x MXU sweet spot); f32 accumulation, loose check.
    out_bf16 = jax.block_until_ready(mlp_forward(x, params, batch_tile=128,
                                                 param_dtype=jnp.bfloat16))
    assert out_bf16.shape == (B, 1)
    assert float(jnp.max(jnp.abs(out_bf16 - ref))) < 0.1

    print("KERNEL_OK")
</pallas_src>

<mosaic_0001>
module attributes {stable_mosaic.version = 11 : i64} {
  func.func @_mlp_kernel(%arg0: i32, %arg1: memref<128x16xf32, #tpu.memory_space<vmem>>, %arg2: memref<16x256xf32, #tpu.memory_space<vmem>>, %arg3: memref<1x256xf32, #tpu.memory_space<vmem>>, %arg4: memref<256x256xf32, #tpu.memory_space<vmem>>, %arg5: memref<1x256xf32, #tpu.memory_space<vmem>>, %arg6: memref<256x256xf32, #tpu.memory_space<vmem>>, %arg7: memref<1x256xf32, #tpu.memory_space<vmem>>, %arg8: memref<256x128xf32, #tpu.memory_space<vmem>>, %arg9: memref<1x128xf32, #tpu.memory_space<vmem>>, %arg10: memref<128x128xf32, #tpu.memory_space<vmem>>, %arg11: memref<1x128xf32, #tpu.memory_space<vmem>>, %arg12: memref<128x128xf32, #tpu.memory_space<vmem>>, %arg13: memref<1x128xf32, #tpu.memory_space<vmem>>, %arg14: memref<128x128xf32, #tpu.memory_space<vmem>>, %arg15: memref<1x128xf32, #tpu.memory_space<vmem>>, %arg16: memref<128x128xf32, #tpu.memory_space<vmem>>, %arg17: memref<1x128xf32, #tpu.memory_space<vmem>>, %arg18: memref<128x128xf32, #tpu.memory_space<vmem>>) attributes {dimension_semantics = [#tpu.dimension_semantics<parallel>], iteration_bounds = array<i64: 2>, scalar_prefetch = 0 : i64, scratch_operands = 0 : i64, tpu.core_type = #tpu.core_type<tc>, window_params = [{transform_indices = @transform_0, window_bounds = array<i64: 128, 16>}, {pipeline_mode = #tpu.pipeline_mode<synchronous>, transform_indices = @transform_1, window_bounds = array<i64: 16, 256>}, {pipeline_mode = #tpu.pipeline_mode<synchronous>, transform_indices = @transform_2, window_bounds = array<i64: 1, 256>}, {pipeline_mode = #tpu.pipeline_mode<synchronous>, transform_indices = @transform_3, window_bounds = array<i64: 256, 256>}, {pipeline_mode = #tpu.pipeline_mode<synchronous>, transform_indices = @transform_4, window_bounds = array<i64: 1, 256>}, {pipeline_mode = #tpu.pipeline_mode<synchronous>, transform_indices = @transform_5, window_bounds = array<i64: 256, 256>}, {pipeline_mode = #tpu.pipeline_mode<synchronous>, transform_indices = @transform_6, window_bounds = array<i64: 1, 256>}, {pipeline_mode = #tpu.pipeline_mode<synchronous>, transform_indices = @transform_7, window_bounds = array<i64: 256, 128>}, {pipeline_mode = #tpu.pipeline_mode<synchronous>, transform_indices = @transform_8, window_bounds = array<i64: 1, 128>}, {pipeline_mode = #tpu.pipeline_mode<synchronous>, transform_indices = @transform_9, window_bounds = array<i64: 128, 128>}, {pipeline_mode = #tpu.pipeline_mode<synchronous>, transform_indices = @transform_10, window_bounds = array<i64: 1, 128>}, {pipeline_mode = #tpu.pipeline_mode<synchronous>, transform_indices = @transform_11, window_bounds = array<i64: 128, 128>}, {pipeline_mode = #tpu.pipeline_mode<synchronous>, transform_indices = @transform_12, window_bounds = array<i64: 1, 128>}, {pipeline_mode = #tpu.pipeline_mode<synchronous>, transform_indices = @transform_13, window_bounds = array<i64: 128, 128>}, {pipeline_mode = #tpu.pipeline_mode<synchronous>, transform_indices = @transform_14, window_bounds = array<i64: 1, 128>}, {pipeline_mode = #tpu.pipeline_mode<synchronous>, transform_indices = @transform_15, window_bounds = array<i64: 128, 128>}, {pipeline_mode = #tpu.pipeline_mode<synchronous>, transform_indices = @transform_16, window_bounds = array<i64: 1, 128>}, {transform_indices = @transform_17, window_bounds = array<i64: 128, 128>}]} {
    %c0 = arith.constant 0 : index
    %c0_0 = arith.constant 0 : index
    %0 = vector.load %arg1[%c0, %c0_0] : memref<128x16xf32, #tpu.memory_space<vmem>>, vector<128x16xf32>
    %c0_1 = arith.constant 0 : index
    %c0_2 = arith.constant 0 : index
    %1 = vector.load %arg2[%c0_1, %c0_2] : memref<16x256xf32, #tpu.memory_space<vmem>>, vector<16x256xf32>
    %c0_3 = arith.constant 0 : index
    %c0_4 = arith.constant 0 : index
    %2 = vector.load %arg3[%c0_3, %c0_4] : memref<1x256xf32, #tpu.memory_space<vmem>>, vector<1x256xf32>
    %cst = arith.constant dense<0.000000e+00> : vector<128x256xf32>
    %3 = tpu.matmul %0, %1, %cst {dimension_numbers = #tpu.dot_dimension_numbers<[1], [0], [0], [1], [0, 0, 1, 1], [], []>} : vector<128x16xf32>, vector<16x256xf32>, vector<128x256xf32> -> vector<128x256xf32>
    %4 = vector.broadcast %2 : vector<1x256xf32> to vector<128x256xf32>
    %5 = arith.addf %3, %4 : vector<128x256xf32>
    %cst_5 = arith.constant 0.000000e+00 : f32
    %6 = vector.broadcast %cst_5 : f32 to vector<128x256xf32>
    %7 = arith.maximumf %5, %6 : vector<128x256xf32>
    %c0_6 = arith.constant 0 : index
    %c0_7 = arith.constant 0 : index
    %8 = vector.load %arg4[%c0_6, %c0_7] : memref<256x256xf32, #tpu.memory_space<vmem>>, vector<256x256xf32>
    %c0_8 = arith.constant 0 : index
    %c0_9 = arith.constant 0 : index
    %9 = vector.load %arg5[%c0_8, %c0_9] : memref<1x256xf32, #tpu.memory_space<vmem>>, vector<1x256xf32>
    %cst_10 = arith.constant dense<0.000000e+00> : vector<128x256xf32>
    %10 = tpu.matmul %7, %8, %cst_10 {dimension_numbers = #tpu.dot_dimension_numbers<[1], [0], [0], [1], [0, 0, 1, 1], [], []>} : vector<128x256xf32>, vector<256x256xf32>, vector<128x256xf32> -> vector<128x256xf32>
    %11 = vector.broadcast %9 : vector<1x256xf32> to vector<128x256xf32>
    %12 = arith.addf %10, %11 : vector<128x256xf32>
    %cst_11 = arith.constant 0.000000e+00 : f32
    %13 = vector.broadcast %cst_11 : f32 to vector<128x256xf32>
    %14 = arith.maximumf %12, %13 : vector<128x256xf32>
    %c0_12 = arith.constant 0 : index
    %c0_13 = arith.constant 0 : index
    %15 = vector.load %arg6[%c0_12, %c0_13] : memref<256x256xf32, #tpu.memory_space<vmem>>, vector<256x256xf32>
    %c0_14 = arith.constant 0 : index
    %c0_15 = arith.constant 0 : index
    %16 = vector.load %arg7[%c0_14, %c0_15] : memref<1x256xf32, #tpu.memory_space<vmem>>, vector<1x256xf32>
    %cst_16 = arith.constant dense<0.000000e+00> : vector<128x256xf32>
    %17 = tpu.matmul %14, %15, %cst_16 {dimension_numbers = #tpu.dot_dimension_numbers<[1], [0], [0], [1], [0, 0, 1, 1], [], []>} : vector<128x256xf32>, vector<256x256xf32>, vector<128x256xf32> -> vector<128x256xf32>
    %18 = vector.broadcast %16 : vector<1x256xf32> to vector<128x256xf32>
    %19 = arith.addf %17, %18 : vector<128x256xf32>
    %cst_17 = arith.constant 0.000000e+00 : f32
    %20 = vector.broadcast %cst_17 : f32 to vector<128x256xf32>
    %21 = arith.maximumf %19, %20 : vector<128x256xf32>
    %c0_18 = arith.constant 0 : index
    %c0_19 = arith.constant 0 : index
    %22 = vector.load %arg8[%c0_18, %c0_19] : memref<256x128xf32, #tpu.memory_space<vmem>>, vector<256x128xf32>
    %c0_20 = arith.constant 0 : index
    %c0_21 = arith.constant 0 : index
    %23 = vector.load %arg9[%c0_20, %c0_21] : memref<1x128xf32, #tpu.memory_space<vmem>>, vector<1x128xf32>
    %cst_22 = arith.constant dense<0.000000e+00> : vector<128x128xf32>
    %24 = tpu.matmul %21, %22, %cst_22 {dimension_numbers = #tpu.dot_dimension_numbers<[1], [0], [0], [1], [0, 0, 1, 1], [], []>} : vector<128x256xf32>, vector<256x128xf32>, vector<128x128xf32> -> vector<128x128xf32>
    %25 = vector.broadcast %23 : vector<1x128xf32> to vector<128x128xf32>
    %26 = arith.addf %24, %25 : vector<128x128xf32>
    %cst_23 = arith.constant 0.000000e+00 : f32
    %27 = vector.broadcast %cst_23 : f32 to vector<128x128xf32>
    %28 = arith.maximumf %26, %27 : vector<128x128xf32>
    %c0_24 = arith.constant 0 : index
    %c0_25 = arith.constant 0 : index
    %29 = vector.load %arg10[%c0_24, %c0_25] : memref<128x128xf32, #tpu.memory_space<vmem>>, vector<128x128xf32>
    %c0_26 = arith.constant 0 : index
    %c0_27 = arith.constant 0 : index
    %30 = vector.load %arg11[%c0_26, %c0_27] : memref<1x128xf32, #tpu.memory_space<vmem>>, vector<1x128xf32>
    %cst_28 = arith.constant dense<0.000000e+00> : vector<128x128xf32>
    %31 = tpu.matmul %28, %29, %cst_28 {dimension_numbers = #tpu.dot_dimension_numbers<[1], [0], [0], [1], [0, 0, 1, 1], [], []>} : vector<128x128xf32>, vector<128x128xf32>, vector<128x128xf32> -> vector<128x128xf32>
    %32 = vector.broadcast %30 : vector<1x128xf32> to vector<128x128xf32>
    %33 = arith.addf %31, %32 : vector<128x128xf32>
    %cst_29 = arith.constant 0.000000e+00 : f32
    %34 = vector.broadcast %cst_29 : f32 to vector<128x128xf32>
    %35 = arith.maximumf %33, %34 : vector<128x128xf32>
    %c0_30 = arith.constant 0 : index
    %c0_31 = arith.constant 0 : index
    %36 = vector.load %arg12[%c0_30, %c0_31] : memref<128x128xf32, #tpu.memory_space<vmem>>, vector<128x128xf32>
    %c0_32 = arith.constant 0 : index
    %c0_33 = arith.constant 0 : index
    %37 = vector.load %arg13[%c0_32, %c0_33] : memref<1x128xf32, #tpu.memory_space<vmem>>, vector<1x128xf32>
    %cst_34 = arith.constant dense<0.000000e+00> : vector<128x128xf32>
    %38 = tpu.matmul %35, %36, %cst_34 {dimension_numbers = #tpu.dot_dimension_numbers<[1], [0], [0], [1], [0, 0, 1, 1], [], []>} : vector<128x128xf32>, vector<128x128xf32>, vector<128x128xf32> -> vector<128x128xf32>
    %39 = vector.broadcast %37 : vector<1x128xf32> to vector<128x128xf32>
    %40 = arith.addf %38, %39 : vector<128x128xf32>
    %cst_35 = arith.constant 0.000000e+00 : f32
    %41 = vector.broadcast %cst_35 : f32 to vector<128x128xf32>
    %42 = arith.maximumf %40, %41 : vector<128x128xf32>
    %c0_36 = arith.constant 0 : index
    %c0_37 = arith.constant 0 : index
    %43 = vector.load %arg14[%c0_36, %c0_37] : memref<128x128xf32, #tpu.memory_space<vmem>>, vector<128x128xf32>
    %c0_38 = arith.constant 0 : index
    %c0_39 = arith.constant 0 : index
    %44 = vector.load %arg15[%c0_38, %c0_39] : memref<1x128xf32, #tpu.memory_space<vmem>>, vector<1x128xf32>
    %cst_40 = arith.constant dense<0.000000e+00> : vector<128x128xf32>
    %45 = tpu.matmul %42, %43, %cst_40 {dimension_numbers = #tpu.dot_dimension_numbers<[1], [0], [0], [1], [0, 0, 1, 1], [], []>} : vector<128x128xf32>, vector<128x128xf32>, vector<128x128xf32> -> vector<128x128xf32>
    %46 = vector.broadcast %44 : vector<1x128xf32> to vector<128x128xf32>
    %47 = arith.addf %45, %46 : vector<128x128xf32>
    %cst_41 = arith.constant 0.000000e+00 : f32
    %48 = vector.broadcast %cst_41 : f32 to vector<128x128xf32>
    %49 = arith.maximumf %47, %48 : vector<128x128xf32>
    %c0_42 = arith.constant 0 : index
    %c0_43 = arith.constant 0 : index
    %50 = vector.load %arg16[%c0_42, %c0_43] : memref<128x128xf32, #tpu.memory_space<vmem>>, vector<128x128xf32>
    %c0_44 = arith.constant 0 : index
    %c0_45 = arith.constant 0 : index
    %51 = vector.load %arg17[%c0_44, %c0_45] : memref<1x128xf32, #tpu.memory_space<vmem>>, vector<1x128xf32>
    %cst_46 = arith.constant dense<0.000000e+00> : vector<128x128xf32>
    %52 = tpu.matmul %49, %50, %cst_46 {dimension_numbers = #tpu.dot_dimension_numbers<[1], [0], [0], [1], [0, 0, 1, 1], [], []>} : vector<128x128xf32>, vector<128x128xf32>, vector<128x128xf32> -> vector<128x128xf32>
    %53 = vector.broadcast %51 : vector<1x128xf32> to vector<128x128xf32>
    %54 = arith.addf %52, %53 : vector<128x128xf32>
    %55 = arith.negf %54 : vector<128x128xf32>
    %56 = math.exp %55 : vector<128x128xf32>
    %cst_47 = arith.constant 1.000000e+00 : f32
    %57 = vector.broadcast %cst_47 : f32 to vector<128x128xf32>
    %58 = arith.addf %57, %56 : vector<128x128xf32>
    %59 = arith.divf %57, %58 : vector<128x128xf32>
    %c0_48 = arith.constant 0 : index
    %c0_49 = arith.constant 0 : index
    %60 = vector.load %arg18[%c0_48, %c0_49] : memref<128x128xf32, #tpu.memory_space<vmem>>, vector<128x128xf32>
    tpu.vector_store %arg18[%c0_48, %c0_49], %59 {strides = array<i32>} : memref<128x128xf32, #tpu.memory_space<vmem>>, vector<128x128xf32>,
    return
  }
  func.func @transform_0(%arg0: i32) -> (i32, i32) {
    %c0_i32 = arith.constant 0 : i32
    %c0_i32_0 = arith.constant 0 : i32
    return %arg0, %c0_i32 : i32, i32
  }
  func.func @transform_1(%arg0: i32) -> (i32, i32) {
    %c0_i32 = arith.constant 0 : i32
    %c0_i32_0 = arith.constant 0 : i32
    %c0_i32_1 = arith.constant 0 : i32
    return %c0_i32, %c0_i32_0 : i32, i32
  }
  func.func @transform_2(%arg0: i32) -> (i32, i32) {
    %c0_i32 = arith.constant 0 : i32
    %c0_i32_0 = arith.constant 0 : i32
    %c0_i32_1 = arith.constant 0 : i32
    return %c0_i32, %c0_i32_0 : i32, i32
  }
  func.func @transform_3(%arg0: i32) -> (i32, i32) {
    %c0_i32 = arith.constant 0 : i32
    %c0_i32_0 = arith.constant 0 : i32
    %c0_i32_1 = arith.constant 0 : i32
    return %c0_i32, %c0_i32_0 : i32, i32
  }
  func.func @transform_4(%arg0: i32) -> (i32, i32) {
    %c0_i32 = arith.constant 0 : i32
    %c0_i32_0 = arith.constant 0 : i32
    %c0_i32_1 = arith.constant 0 : i32
    return %c0_i32, %c0_i32_0 : i32, i32
  }
  func.func @transform_5(%arg0: i32) -> (i32, i32) {
    %c0_i32 = arith.constant 0 : i32
    %c0_i32_0 = arith.constant 0 : i32
    %c0_i32_1 = arith.constant 0 : i32
    return %c0_i32, %c0_i32_0 : i32, i32
  }
  func.func @transform_6(%arg0: i32) -> (i32, i32) {
    %c0_i32 = arith.constant 0 : i32
    %c0_i32_0 = arith.constant 0 : i32
    %c0_i32_1 = arith.constant 0 : i32
    return %c0_i32, %c0_i32_0 : i32, i32
  }
  func.func @transform_7(%arg0: i32) -> (i32, i32) {
    %c0_i32 = arith.constant 0 : i32
    %c0_i32_0 = arith.constant 0 : i32
    %c0_i32_1 = arith.constant 0 : i32
    return %c0_i32, %c0_i32_0 : i32, i32
  }
  func.func @transform_8(%arg0: i32) -> (i32, i32) {
    %c0_i32 = arith.constant 0 : i32
    %c0_i32_0 = arith.constant 0 : i32
    %c0_i32_1 = arith.constant 0 : i32
    return %c0_i32, %c0_i32_0 : i32, i32
  }
  func.func @transform_9(%arg0: i32) -> (i32, i32) {
    %c0_i32 = arith.constant 0 : i32
    %c0_i32_0 = arith.constant 0 : i32
    %c0_i32_1 = arith.constant 0 : i32
    return %c0_i32, %c0_i32_0 : i32, i32
  }
  func.func @transform_10(%arg0: i32) -> (i32, i32) {
    %c0_i32 = arith.constant 0 : i32
    %c0_i32_0 = arith.constant 0 : i32
    %c0_i32_1 = arith.constant 0 : i32
    return %c0_i32, %c0_i32_0 : i32, i32
  }
  func.func @transform_11(%arg0: i32) -> (i32, i32) {
    %c0_i32 = arith.constant 0 : i32
    %c0_i32_0 = arith.constant 0 : i32
    %c0_i32_1 = arith.constant 0 : i32
    return %c0_i32, %c0_i32_0 : i32, i32
  }
  func.func @transform_12(%arg0: i32) -> (i32, i32) {
    %c0_i32 = arith.constant 0 : i32
    %c0_i32_0 = arith.constant 0 : i32
    %c0_i32_1 = arith.constant 0 : i32
    return %c0_i32, %c0_i32_0 : i32, i32
  }
  func.func @transform_13(%arg0: i32) -> (i32, i32) {
    %c0_i32 = arith.constant 0 : i32
    %c0_i32_0 = arith.constant 0 : i32
    %c0_i32_1 = arith.constant 0 : i32
    return %c0_i32, %c0_i32_0 : i32, i32
  }
  func.func @transform_14(%arg0: i32) -> (i32, i32) {
    %c0_i32 = arith.constant 0 : i32
    %c0_i32_0 = arith.constant 0 : i32
    %c0_i32_1 = arith.constant 0 : i32
    return %c0_i32, %c0_i32_0 : i32, i32
  }
  func.func @transform_15(%arg0: i32) -> (i32, i32) {
    %c0_i32 = arith.constant 0 : i32
    %c0_i32_0 = arith.constant 0 : i32
    %c0_i32_1 = arith.constant 0 : i32
    return %c0_i32, %c0_i32_0 : i32, i32
  }
  func.func @transform_16(%arg0: i32) -> (i32, i32) {
    %c0_i32 = arith.constant 0 : i32
    %c0_i32_0 = arith.constant 0 : i32
    %c0_i32_1 = arith.constant 0 : i32
    return %c0_i32, %c0_i32_0 : i32, i32
  }
  func.func @transform_17(%arg0: i32) -> (i32, i32) {
    %c0_i32 = arith.constant 0 : i32
    %c0_i32_0 = arith.constant 0 : i32
    return %arg0, %c0_i32 : i32, i32
  }
}

</mosaic_0001>

<llo_original>
// kernel: tpu_custom_call.1
$region0: #{tpu_custom_call.1}
  #allocation0 [shape = 'u32[]', space=smem, size = 0x4, offset = 0x4, fixed_abs, tag = 'smem constant byte address 0x4 - core index']
  #allocation1 [shape = 'u32[72,128]{1,0:T(1,128)}', space=vmem, size = 0x9000, scoped, tag = 'internal scratch']
  %s0 = inlined_call_operand.vmem [shape: f32[256,16], index: 0, kind: input, shape index: {}]
  %s1 = inlined_call_operand.vmem [shape: f32[16,256], index: 1, kind: input, shape index: {}]
  %s2 = inlined_call_operand.vmem [shape: f32[1,256], index: 2, kind: input, shape index: {}]
  %s3 = inlined_call_operand.hbm [shape: f32[256,256], index: 3, kind: input, shape index: {}]
  %s4 = inlined_call_operand.vmem [shape: f32[1,256], index: 4, kind: input, shape index: {}]
  %s5 = inlined_call_operand.hbm [shape: f32[256,256], index: 5, kind: input, shape index: {}]
  %s6 = inlined_call_operand.vmem [shape: f32[1,256], index: 6, kind: input, shape index: {}]
  %s7 = inlined_call_operand.vmem [shape: f32[256,128], index: 7, kind: input, shape index: {}]
  %s8 = inlined_call_operand.vmem [shape: f32[1,128], index: 8, kind: input, shape index: {}]
  %s9 = inlined_call_operand.hbm [shape: f32[128,128], index: 9, kind: input, shape index: {}]
  %s10 = inlined_call_operand.hbm [shape: f32[1,128], index: 10, kind: input, shape index: {}]
  %s11 = inlined_call_operand.hbm [shape: f32[128,128], index: 11, kind: input, shape index: {}]
  %s12 = inlined_call_operand.vmem [shape: f32[1,128], index: 12, kind: input, shape index: {}]
  %s13 = inlined_call_operand.hbm [shape: f32[128,128], index: 13, kind: input, shape index: {}]
  %s14 = inlined_call_operand.vmem [shape: f32[1,128], index: 14, kind: input, shape index: {}]
  %s15 = inlined_call_operand.hbm [shape: f32[128,128], index: 15, kind: input, shape index: {}]
  %s16 = inlined_call_operand.vmem [shape: f32[1,128], index: 16, kind: input, shape index: {}]
  %s17 = inlined_call_operand.hbm [shape: f32[256,128], index: 17, kind: output, shape index: {}]
  %s18 = sld [smem:[#allocation0]]
  $region129: #{tpu_custom_call.1} parent=0
    _
  %s20 = ssub.s32 1, %s18
  %s21 = scalar_select 0, %s20, %s18
  $region1: #{tpu_custom_call.1} parent=0
    #allocation2 [shape = 'u8[262144]{0}', space=vmem, size = 0x40000, scoped, tag = 'input window, operand 3, single buffered']
    #allocation3 [shape = 's32[2]{0}', space=sflag, size = 0x8, scoped, tag = 'scoped memory for tpu_custom_call.1']
    #allocation4 [shape = 's32[2]{0}', space=sflag, size = 0x8, scoped, tag = 'scoped memory for tpu_custom_call.1']
    #allocation5 [shape = 'u8[262144]{0}', space=vmem, size = 0x40000, scoped, tag = 'input window, operand 5, single buffered']
    #allocation6 [shape = 's32[1]{0}', space=sflag, size = 0x4, scoped, tag = 'scoped memory for tpu_custom_call.1']
    #allocation7 [shape = 'u8[65536]{0}', space=vmem, size = 0x10000, scoped, tag = 'input window, operand 9, single buffered']
    #allocation8 [shape = 'u8[512]{0}', space=vmem, size = 0x400, scoped, tag = 'input window, operand 10, single buffered']
    #allocation9 [shape = 's32[1]{0}', space=sflag, size = 0x4, scoped, tag = 'scoped memory for tpu_custom_call.1']
    #allocation10 [shape = 'u8[65536]{0}', space=vmem, size = 0x10000, scoped, tag = 'input window, operand 11, single buffered']
    #allocation11 [shape = 'u8[65536]{0}', space=vmem, size = 0x10000, scoped, tag = 'input window, operand 13, single buffered']
    #allocation12 [shape = 's32[1]{0}', space=sflag, size = 0x4, scoped, tag = 'scoped memory for tpu_custom_call.1']
    #allocation13 [shape = 'u8[65536]{0}', space=vmem, size = 0x10000, scoped, tag = 'input window, operand 15, single buffered']
    #allocation14 [shape = 'u8[131072]{0}', space=vmem, size = 0x20000, scoped, tag = 'output window, operand 0']
    %22 = vsyncpa [#allocation3], 0
    %23 = vsyncpa [#allocation6], 0
    %24 = vsyncpa [#allocation9], 0
    %25 = vsyncpa [#allocation12], 0
    %26 = vsyncpa [#allocation4], 0
    %s27 = scalar_lea.sflag [#allocation4], 1
    %28 = vsyncpa %s27, 0
    loop: start=0, step=1, limit=4
    $region2: #{tpu_custom_call.1} parent=1 // loop_pre_header
      _
    $region3: #{tpu_custom_call.1} parent=1 // loop_header
      %s30 = sphi 0, %s34
      %p31 = scmp.ge.s32.totalorder %s30, 4
      %s40 = sphi 0, %s42
      %s43 = sphi 0, %s40
      %s44 = sphi 0, %s43
      %s60 = sphi 0, %s44
      %s64 = sphi 0, %s64
      %s66 = sphi 0, %s64
      %s67 = sphi 0, %s66
      %s81 = sphi 0, %s67
      %s85 = sphi 0, %s85
      %s87 = sphi 0, %s85
      %s88 = sphi 0, %s87
      %s102 = sphi 0, %s88
      %s106 = sphi 0, %s106
      %s108 = sphi 0, %s106
      %s109 = sphi 0, %s108
      %s123 = sphi 0, %s109
      %s127 = sphi 0, %s127
      %s129 = sphi 0, %s127
      %s130 = sphi 0, %s129
      %s144 = sphi 0, %s130
      %s148 = sphi 0, %s148
      %s150 = sphi 0, %s148
      %s151 = sphi 0, %s150
      %s165 = sphi 0, %s151
      %s169 = sphi 0, %s169
      %s171 = sphi 0, %s169
      %s172 = sphi 0, %s171
      %s186 = sphi 0, %s172
      %s190 = sphi 0, %s190
      %s192 = sphi 0, %s190
      %s193 = sphi 0, %s192
      %s207 = sphi 0, %s193
      %s211 = sphi 0, %s211
      %s213 = sphi 0, %s211
      %s214 = sphi 0, %s213
      %s228 = sphi 0, %s214
      %s232 = sphi 0, %s232
      %s234 = sphi 0, %s232
      %s235 = sphi 0, %s234
      %s249 = sphi 0, %s235
      %s253 = sphi 0, %s253
      %s255 = sphi 0, %s253
      %s256 = sphi 0, %s255
      %s270 = sphi 0, %s256
      %s274 = sphi 0, %s274
      %s276 = sphi 0, %s274
      %s277 = sphi 0, %s276
      %s291 = sphi 0, %s277
      %s295 = sphi 0, %s295
      %s297 = sphi 0, %s295
      %s298 = sphi 0, %s297
      %s312 = sphi 0, %s298
      %s316 = sphi 0, %s316
      %s318 = sphi 0, %s316
      %s319 = sphi 0, %s318
      %s333 = sphi 0, %s319
      %s337 = sphi 0, %s337
      %s339 = sphi 0, %s337
      %s340 = sphi 0, %s339
      %s354 = sphi 0, %s340
      %s358 = sphi 0, %s358
      %s360 = sphi 0, %s358
      %s361 = sphi 0, %s360
      %s375 = sphi 0, %s361
      %s379 = sphi 0, %s379
      %s381 = sphi 0, %s379
      %s382 = sphi 0, %s381
      %s396 = sphi 0, %s382
      %s402 = sphi 0, %s404
      %s405 = sphi 0, %s402
      %s406 = sphi 0, %s405
      %s422 = sphi 0, %s406
    $region4: #{tpu_custom_call.1} parent=1 // loop_header_branch
      %33 = sbr.rel (%p31) target = $region8
    $region5: #{tpu_custom_call.1} parent=1 // loop_body
      %s35 = ssub.s32 %s30, 1
      %s36 = ssub.s32 %s30, 2
      %s37 = sadd.s32 %s30, 1
      %s38 = ssub.s32 %s30, %s37
      %p39 = scmp.eq.s32.totalorder %s38, 0
      %s41 = sadd.s32 %s40, 1
      %s42 = scalar_select %p39, %s40, %s41
      %p45 = pneg %p39
      %p46 = scmp.eq.s32.totalorder %s30, 1
      %p47 = por %p45, %p46
      %p48 = scmp.ne.s32.totalorder %s40, %s43
      %p49 = scmp.eq.s32.totalorder %s30, 0
      %p50 = por %p48, %p49
      %p51 = scmp.ne.s32.totalorder %s40, %s43
      %p52 = scmp.eq.s32.totalorder %s35, 1
      %p53 = por %p51, %p52
      %p54 = scmp.ne.s32.totalorder %s43, %s44
      %p55 = scmp.eq.s32.totalorder %s35, 0
      %p56 = por %p54, %p55
      %p57 = scmp.ne.s32.totalorder %s43, %s44
      %p58 = scmp.eq.s32.totalorder %s36, 1
      %p59 = por %p57, %p58
      %p61 = scmp.ne.s32.totalorder %s44, %s60
      %p62 = scmp.eq.s32.totalorder %s36, 0
      %p63 = por %p61, %p62
      %s65 = sadd.s32 %s64, 1
      %p68 = scmp.eq.s32.totalorder %s30, 1
      %p69 = scmp.ne.s32.totalorder %s64, %s66
      %p70 = scmp.eq.s32.totalorder %s30, 0
      %p71 = por %p69, %p70
      %p72 = scmp.ne.s32.totalorder %s64, %s66
      %p73 = scmp.eq.s32.totalorder %s35, 1
      %p74 = por %p72, %p73
      %p75 = scmp.ne.s32.totalorder %s66, %s67
      %p76 = scmp.eq.s32.totalorder %s35, 0
      %p77 = por %p75, %p76
      %p78 = scmp.ne.s32.totalorder %s66, %s67
      %p79 = scmp.eq.s32.totalorder %s36, 1
      %p80 = por %p78, %p79
      %p82 = scmp.ne.s32.totalorder %s67, %s81
      %p83 = scmp.eq.s32.totalorder %s36, 0
      %p84 = por %p82, %p83
      %s86 = sadd.s32 %s85, 1
      %p89 = scmp.eq.s32.totalorder %s30, 1
      %p90 = scmp.ne.s32.totalorder %s85, %s87
      %p91 = scmp.eq.s32.totalorder %s30, 0
      %p92 = por %p90, %p91
      %p93 = scmp.ne.s32.totalorder %s85, %s87
      %p94 = scmp.eq.s32.totalorder %s35, 1
      %p95 = por %p93, %p94
      %p96 = scmp.ne.s32.totalorder %s87, %s88
      %p97 = scmp.eq.s32.totalorder %s35, 0
      %p98 = por %p96, %p97
      %p99 = scmp.ne.s32.totalorder %s87, %s88
      %p100 = scmp.eq.s32.totalorder %s36, 1
      %p101 = por %p99, %p100
      %p103 = scmp.ne.s32.totalorder %s88, %s102
      %p104 = scmp.eq.s32.totalorder %s36, 0
      %p105 = por %p103, %p104
      %s107 = sadd.s32 %s106, 1
      %p110 = scmp.eq.s32.totalorder %s30, 1
      %p111 = scmp.ne.s32.totalorder %s106, %s108
      %p112 = scmp.eq.s32.totalorder %s30, 0
      %p113 = por %p111, %p112
      %p114 = scmp.ne.s32.totalorder %s106, %s108
      %p115 = scmp.eq.s32.totalorder %s35, 1
      %p116 = por %p114, %p115
      %p117 = scmp.ne.s32.totalorder %s108, %s109
      %p118 = scmp.eq.s32.totalorder %s35, 0
      %p119 = por %p117, %p118
      %p120 = scmp.ne.s32.totalorder %s108, %s109
      %p121 = scmp.eq.s32.totalorder %s36, 1
      %p122 = por %p120, %p121
      %p124 = scmp.ne.s32.totalorder %s109, %s123
      %p125 = scmp.eq.s32.totalorder %s36, 0
      %p126 = por %p124, %p125
      %s128 = sadd.s32 %s127, 1
      %p131 = scmp.eq.s32.totalorder %s30, 1
      %p132 = scmp.ne.s32.totalorder %s127, %s129
      %p133 = scmp.eq.s32.totalorder %s30, 0
      %p134 = por %p132, %p133
      %p135 = scmp.ne.s32.totalorder %s127, %s129
      %p136 = scmp.eq.s32.totalorder %s35, 1
      %p137 = por %p135, %p136
      %p138 = scmp.ne.s32.totalorder %s129, %s130
      %p139 = scmp.eq.s32.totalorder %s35, 0
      %p140 = por %p138, %p139
      %p141 = scmp.ne.s32.totalorder %s129, %s130
      %p142 = scmp.eq.s32.totalorder %s36, 1
      %p143 = por %p141, %p142
      %p145 = scmp.ne.s32.totalorder %s130, %s144
      %p146 = scmp.eq.s32.totalorder %s36, 0
      %p147 = por %p145, %p146
      %s149 = sadd.s32 %s148, 1
      %p152 = scmp.eq.s32.totalorder %s30, 1
      %p153 = scmp.ne.s32.totalorder %s148, %s150
      %p154 = scmp.eq.s32.totalorder %s30, 0
      %p155 = por %p153, %p154
      %p156 = scmp.ne.s32.totalorder %s148, %s150
      %p157 = scmp.eq.s32.totalorder %s35, 1
      %p158 = por %p156, %p157
      %p159 = scmp.ne.s32.totalorder %s150, %s151
      %p160 = scmp.eq.s32.totalorder %s35, 0
      %p161 = por %p159, %p160
      %p162 = scmp.ne.s32.totalorder %s150, %s151
      %p163 = scmp.eq.s32.totalorder %s36, 1
      %p164 = por %p162, %p163
      %p166 = scmp.ne.s32.totalorder %s151, %s165
      %p167 = scmp.eq.s32.totalorder %s36, 0
      %p168 = por %p166, %p167
      %s170 = sadd.s32 %s169, 1
      %p173 = scmp.eq.s32.totalorder %s30, 1
      %p174 = scmp.ne.s32.totalorder %s169, %s171
      %p175 = scmp.eq.s32.totalorder %s30, 0
      %p176 = por %p174, %p175
      %p177 = scmp.ne.s32.totalorder %s169, %s171
      %p178 = scmp.eq.s32.totalorder %s35, 1
      %p179 = por %p177, %p178
      %p180 = scmp.ne.s32.totalorder %s171, %s172
      %p181 = scmp.eq.s32.totalorder %s35, 0
      %p182 = por %p180, %p181
      %p183 = scmp.ne.s32.totalorder %s171, %s172
      %p184 = scmp.eq.s32.totalorder %s36, 1
      %p185 = por %p183, %p184
      %p187 = scmp.ne.s32.totalorder %s172, %s186
      %p188 = scmp.eq.s32.totalorder %s36, 0
      %p189 = por %p187, %p188
      %s191 = sadd.s32 %s190, 1
      %p194 = scmp.eq.s32.totalorder %s30, 1
      %p195 = scmp.ne.s32.totalorder %s190, %s192
      %p196 = scmp.eq.s32.totalorder %s30, 0
      %p197 = por %p195, %p196
      %p198 = scmp.ne.s32.totalorder %s190, %s192
      %p199 = scmp.eq.s32.totalorder %s35, 1
      %p200 = por %p198, %p199
      %p201 = scmp.ne.s32.totalorder %s192, %s193
      %p202 = scmp.eq.s32.totalorder %s35, 0
      %p203 = por %p201, %p202
      %p204 = scmp.ne.s32.totalorder %s192, %s193
      %p205 = scmp.eq.s32.totalorder %s36, 1
      %p206 = por %p204, %p205
      %p208 = scmp.ne.s32.totalorder %s193, %s207
      %p209 = scmp.eq.s32.totalorder %s36, 0
      %p210 = por %p208, %p209
      %s212 = sadd.s32 %s211, 1
      %p215 = scmp.eq.s32.totalorder %s30, 1
      %p216 = scmp.ne.s32.totalorder %s211, %s213
      %p217 = scmp.eq.s32.totalorder %s30, 0
      %p218 = por %p216, %p217
      %p219 = scmp.ne.s32.totalorder %s211, %s213
      %p220 = scmp.eq.s32.totalorder %s35, 1
      %p221 = por %p219, %p220
      %p222 = scmp.ne.s32.totalorder %s213, %s214
      %p223 = scmp.eq.s32.totalorder %s35, 0
      %p224 = por %p222, %p223
      %p225 = scmp.ne.s32.totalorder %s213, %s214
      %p226 = scmp.eq.s32.totalorder %s36, 1
      %p227 = por %p225, %p226
      %p229 = scmp.ne.s32.totalorder %s214, %s228
      %p230 = scmp.eq.s32.totalorder %s36, 0
      %p231 = por %p229, %p230
      %s233 = sadd.s32 %s232, 1
      %p236 = scmp.eq.s32.totalorder %s30, 1
      %p237 = scmp.ne.s32.totalorder %s232, %s234
      %p238 = scmp.eq.s32.totalorder %s30, 0
      %p239 = por %p237, %p238
      %p240 = scmp.ne.s32.totalorder %s232, %s234
      %p241 = scmp.eq.s32.totalorder %s35, 1
      %p242 = por %p240, %p241
      %p243 = scmp.ne.s32.totalorder %s234, %s235
      %p244 = scmp.eq.s32.totalorder %s35, 0
      %p245 = por %p243, %p244
      %p246 = scmp.ne.s32.totalorder %s234, %s235
      %p247 = scmp.eq.s32.totalorder %s36, 1
      %p248 = por %p246, %p247
      %p250 = scmp.ne.s32.totalorder %s235, %s249
      %p251 = scmp.eq.s32.totalorder %s36, 0
      %p252 = por %p250, %p251
      %s254 = sadd.s32 %s253, 1
      %p257 = scmp.eq.s32.totalorder %s30, 1
      %p258 = scmp.ne.s32.totalorder %s253, %s255
      %p259 = scmp.eq.s32.totalorder %s30, 0
      %p260 = por %p258, %p259
      %p261 = scmp.ne.s32.totalorder %s253, %s255
      %p262 = scmp.eq.s32.totalorder %s35, 1
      %p263 = por %p261, %p262
      %p264 = scmp.ne.s32.totalorder %s255, %s256
      %p265 = scmp.eq.s32.totalorder %s35, 0
      %p266 = por %p264, %p265
      %p267 = scmp.ne.s32.totalorder %s255, %s256
      %p268 = scmp.eq.s32.totalorder %s36, 1
      %p269 = por %p267, %p268
      %p271 = scmp.ne.s32.totalorder %s256, %s270
      %p272 = scmp.eq.s32.totalorder %s36, 0
      %p273 = por %p271, %p272
      %s275 = sadd.s32 %s274, 1
      %p278 = scmp.eq.s32.totalorder %s30, 1
      %p279 = scmp.ne.s32.totalorder %s274, %s276
      %p280 = scmp.eq.s32.totalorder %s30, 0
      %p281 = por %p279, %p280
      %p282 = scmp.ne.s32.totalorder %s274, %s276
      %p283 = scmp.eq.s32.totalorder %s35, 1
      %p284 = por %p282, %p283
      %p285 = scmp.ne.s32.totalorder %s276, %s277
      %p286 = scmp.eq.s32.totalorder %s35, 0
      %p287 = por %p285, %p286
      %p288 = scmp.ne.s32.totalorder %s276, %s277
      %p289 = scmp.eq.s32.totalorder %s36, 1
      %p290 = por %p288, %p289
      %p292 = scmp.ne.s32.totalorder %s277, %s291
      %p293 = scmp.eq.s32.totalorder %s36, 0
      %p294 = por %p292, %p293
      %s296 = sadd.s32 %s295, 1
      %p299 = scmp.eq.s32.totalorder %s30, 1
      %p300 = scmp.ne.s32.totalorder %s295, %s297
      %p301 = scmp.eq.s32.totalorder %s30, 0
      %p302 = por %p300, %p301
      %p303 = scmp.ne.s32.totalorder %s295, %s297
      %p304 = scmp.eq.s32.totalorder %s35, 1
      %p305 = por %p303, %p304
      %p306 = scmp.ne.s32.totalorder %s297, %s298
      %p307 = scmp.eq.s32.totalorder %s35, 0
      %p308 = por %p306, %p307
      %p309 = scmp.ne.s32.totalorder %s297, %s298
      %p310 = scmp.eq.s32.totalorder %s36, 1
      %p311 = por %p309, %p310
      %p313 = scmp.ne.s32.totalorder %s298, %s312
      %p314 = scmp.eq.s32.totalorder %s36, 0
      %p315 = por %p313, %p314
      %s317 = sadd.s32 %s316, 1
      %p320 = scmp.eq.s32.totalorder %s30, 1
      %p321 = scmp.ne.s32.totalorder %s316, %s318
      %p322 = scmp.eq.s32.totalorder %s30, 0
      %p323 = por %p321, %p322
      %p324 = scmp.ne.s32.totalorder %s316, %s318
      %p325 = scmp.eq.s32.totalorder %s35, 1
      %p326 = por %p324, %p325
      %p327 = scmp.ne.s32.totalorder %s318, %s319
      %p328 = scmp.eq.s32.totalorder %s35, 0
      %p329 = por %p327, %p328
      %p330 = scmp.ne.s32.totalorder %s318, %s319
      %p331 = scmp.eq.s32.totalorder %s36, 1
      %p332 = por %p330, %p331
      %p334 = scmp.ne.s32.totalorder %s319, %s333
      %p335 = scmp.eq.s32.totalorder %s36, 0
      %p336 = por %p334, %p335
      %s338 = sadd.s32 %s337, 1
      %p341 = scmp.eq.s32.totalorder %s30, 1
      %p342 = scmp.ne.s32.totalorder %s337, %s339
      %p343 = scmp.eq.s32.totalorder %s30, 0
      %p344 = por %p342, %p343
      %p345 = scmp.ne.s32.totalorder %s337, %s339
      %p346 = scmp.eq.s32.totalorder %s35, 1
      %p347 = por %p345, %p346
      %p348 = scmp.ne.s32.totalorder %s339, %s340
      %p349 = scmp.eq.s32.totalorder %s35, 0
      %p350 = por %p348, %p349
      %p351 = scmp.ne.s32.totalorder %s339, %s340
      %p352 = scmp.eq.s32.totalorder %s36, 1
      %p353 = por %p351, %p352
      %p355 = scmp.ne.s32.totalorder %s340, %s354
      %p356 = scmp.eq.s32.totalorder %s36, 0
      %p357 = por %p355, %p356
      %s359 = sadd.s32 %s358, 1
      %p362 = scmp.eq.s32.totalorder %s30, 1
      %p363 = scmp.ne.s32.totalorder %s358, %s360
      %p364 = scmp.eq.s32.totalorder %s30, 0
      %p365 = por %p363, %p364
      %p366 = scmp.ne.s32.totalorder %s358, %s360
      %p367 = scmp.eq.s32.totalorder %s35, 1
      %p368 = por %p366, %p367
      %p369 = scmp.ne.s32.totalorder %s360, %s361
      %p370 = scmp.eq.s32.totalorder %s35, 0
      %p371 = por %p369, %p370
      %p372 = scmp.ne.s32.totalorder %s360, %s361
      %p373 = scmp.eq.s32.totalorder %s36, 1
      %p374 = por %p372, %p373
      %p376 = scmp.ne.s32.totalorder %s361, %s375
      %p377 = scmp.eq.s32.totalorder %s36, 0
      %p378 = por %p376, %p377
      %s380 = sadd.s32 %s379, 1
      %p383 = scmp.eq.s32.totalorder %s30, 1
      %p384 = scmp.ne.s32.totalorder %s379, %s381
      %p385 = scmp.eq.s32.totalorder %s30, 0
      %p386 = por %p384, %p385
      %p387 = scmp.ne.s32.totalorder %s379, %s381
      %p388 = scmp.eq.s32.totalorder %s35, 1
      %p389 = por %p387, %p388
      %p390 = scmp.ne.s32.totalorder %s381, %s382
      %p391 = scmp.eq.s32.totalorder %s35, 0
      %p392 = por %p390, %p391
      %p393 = scmp.ne.s32.totalorder %s381, %s382
      %p394 = scmp.eq.s32.totalorder %s36, 1
      %p395 = por %p393, %p394
      %p397 = scmp.ne.s32.totalorder %s382, %s396
      %p398 = scmp.eq.s32.totalorder %s36, 0
      %p399 = por %p397, %p398
      %s400 = ssub.s32 %s30, %s37
      %p401 = scmp.eq.s32.totalorder %s400, 0
      %s403 = sadd.s32 %s402, 1
      %s404 = scalar_select %p401, %s402, %s403
      %p407 = pneg %p401
      %p408 = scmp.eq.s32.totalorder %s30, 1
      %p409 = por %p407, %p408
      %p410 = scmp.ne.s32.totalorder %s402, %s405
      %p411 = scmp.eq.s32.totalorder %s30, 0
      %p412 = por %p410, %p411
      %p413 = scmp.ne.s32.totalorder %s402, %s405
      %p414 = scmp.eq.s32.totalorder %s35, 1
      %p415 = por %p413, %p414
      %p416 = scmp.ne.s32.totalorder %s405, %s406
      %p417 = scmp.eq.s32.totalorder %s35, 0
      %p418 = por %p416, %p417
      %p419 = scmp.ne.s32.totalorder %s405, %s406
      %p420 = scmp.eq.s32.totalorder %s36, 1
      %p421 = por %p419, %p420
      %p423 = scmp.ne.s32.totalorder %s406, %s422
      %p424 = scmp.eq.s32.totalorder %s36, 0
      %p425 = por %p423, %p424
      %p426 = scmp.le.s32.totalorder 1, %s30
      %p427 = scmp.lt.s32.totalorder %s30, 3
      %p428 = pnand %p426, %p427
      %p429 = pneg %p428
      // Predicated region
      $region9: #{tpu_custom_call.1} parent=5 // pred_check
        _
      $region10: #{tpu_custom_call.1} parent=5 // pred_check_branch
        %431 = sbr.rel (%p428) target = $region12
      $region11: #{tpu_custom_call.1} parent=5 // pred_region
        %s432 = ssub.s32 %s30, 1
        // Predicated region
        $region13: #{tpu_custom_call.1} parent=11 // pred_check
          %p433 = pneg %p77
        $region14: #{tpu_custom_call.1} parent=11 // pred_check_branch
          %435 = sbr.rel (%p433) target = $region16
        $region15: #{tpu_custom_call.1} parent=11 // pred_region
          _
        $region16: #{tpu_custom_call.1} parent=11 // pred_fallthru
          _
        // Predicated region
        $region17: #{tpu_custom_call.1} parent=11 // pred_check
          %p436 = pneg %p98
        $region18: #{tpu_custom_call.1} parent=11 // pred_check_branch
          %438 = sbr.rel (%p436) target = $region20
        $region19: #{tpu_custom_call.1} parent=11 // pred_region
          _
        $region20: #{tpu_custom_call.1} parent=11 // pred_fallthru
          _
        // Predicated region
        $region21: #{tpu_custom_call.1} parent=11 // pred_check
          %p439 = pneg %p119
        $region22: #{tpu_custom_call.1} parent=11 // pred_check_branch
          %441 = sbr.rel (%p439) target = $region24
        $region23: #{tpu_custom_call.1} parent=11 // pred_region
          %443 = vsyncadd [#allocation3], 0
          %s444 = sshll.u32 %s3, 4
          %s445 = int_to_ptr.hbm [resolvable:$true] %s444
          %s446 = sshll.u32 [#allocation2], 4
          %s447 = int_to_ptr.vmem [resolvable:$true] %s446
          %452 = dma.hbm_to_vmem [thread:$0]  %s445, 8192, %s447, [#allocation3], 256, 256, 16
        $region24: #{tpu_custom_call.1} parent=11 // pred_fallthru
          _
        // Predicated region
        $region25: #{tpu_custom_call.1} parent=11 // pred_check
          %p453 = pneg %p140
        $region26: #{tpu_custom_call.1} parent=11 // pred_check_branch
          %455 = sbr.rel (%p453) target = $region28
        $region27: #{tpu_custom_call.1} parent=11 // pred_region
          _
        $region28: #{tpu_custom_call.1} parent=11 // pred_fallthru
          _
        // Predicated region
        $region29: #{tpu_custom_call.1} parent=11 // pred_check
          %p456 = pneg %p161
        $region30: #{tpu_custom_call.1} parent=11 // pred_check_branch
          %458 = sbr.rel (%p456) target = $region32
        $region31: #{tpu_custom_call.1} parent=11 // pred_region
          %460 = vsyncadd [#allocation6], 0
          %s461 = sshll.u32 %s5, 4
          %s462 = int_to_ptr.hbm [resolvable:$true] %s461
          %s463 = sshll.u32 [#allocation5], 4
          %s464 = int_to_ptr.vmem [resolvable:$true] %s463
          %469 = dma.hbm_to_vmem [thread:$0]  %s462, 8192, %s464, [#allocation6], 256, 256, 16
        $region32: #{tpu_custom_call.1} parent=11 // pred_fallthru
          _
        // Predicated region
        $region33: #{tpu_custom_call.1} parent=11 // pred_check
          %p470 = pneg %p182
        $region34: #{tpu_custom_call.1} parent=11 // pred_check_branch
          %472 = sbr.rel (%p470) target = $region36
        $region35: #{tpu_custom_call.1} parent=11 // pred_region
          _
        $region36: #{tpu_custom_call.1} parent=11 // pred_fallthru
          _
        // Predicated region
        $region37: #{tpu_custom_call.1} parent=11 // pred_check
          %p473 = pneg %p203
        $region38: #{tpu_custom_call.1} parent=11 // pred_check_branch
          %475 = sbr.rel (%p473) target = $region40
        $region39: #{tpu_custom_call.1} parent=11 // pred_region
          _
        $region40: #{tpu_custom_call.1} parent=11 // pred_fallthru
          _
        // Predicated region
        $region41: #{tpu_custom_call.1} parent=11 // pred_check
          %p476 = pneg %p224
        $region42: #{tpu_custom_call.1} parent=11 // pred_check_branch
          %478 = sbr.rel (%p476) target = $region44
        $region43: #{tpu_custom_call.1} parent=11 // pred_region
          _
        $region44: #{tpu_custom_call.1} parent=11 // pred_fallthru
          _
        // Predicated region
        $region45: #{tpu_custom_call.1} parent=11 // pred_check
          %p479 = pneg %p245
        $region46: #{tpu_custom_call.1} parent=11 // pred_check_branch
          %481 = sbr.rel (%p479) target = $region48
        $region47: #{tpu_custom_call.1} parent=11 // pred_region
          %483 = vsyncadd [#allocation6], 0
          %s484 = sshll.u32 %s9, 4
          %s485 = int_to_ptr.hbm [resolvable:$true] %s484
          %s486 = sshll.u32 [#allocation7], 4
          %s487 = int_to_ptr.vmem [resolvable:$true] %s486
          %492 = dma.hbm_to_vmem [thread:$0]  %s485, 2048, %s487, [#allocation6], 128, 128, 8
        $region48: #{tpu_custom_call.1} parent=11 // pred_fallthru
          _
        // Predicated region
        $region49: #{tpu_custom_call.1} parent=11 // pred_check
          %p493 = pneg %p266
        $region50: #{tpu_custom_call.1} parent=11 // pred_check_branch
          %495 = sbr.rel (%p493) target = $region52
        $region51: #{tpu_custom_call.1} parent=11 // pred_region
          %497 = vsyncadd [#allocation9], 0
          %s499 = sshll.u32 %s10, 4
          %s500 = int_to_ptr.hbm [resolvable:$true] %s499
          %s501 = sshll.u32 [#allocation8], 4
          %s502 = int_to_ptr.vmem [resolvable:$true] %s501
          %504 = dma.hbm_to_vmem [thread:$0]  %s500, 16, %s502, [#allocation9]
        $region52: #{tpu_custom_call.1} parent=11 // pred_fallthru
          _
        // Predicated region
        $region53: #{tpu_custom_call.1} parent=11 // pred_check
          %p505 = pneg %p287
        $region54: #{tpu_custom_call.1} parent=11 // pred_check_branch
          %507 = sbr.rel (%p505) target = $region56
        $region55: #{tpu_custom_call.1} parent=11 // pred_region
          %509 = vsyncadd [#allocation9], 0
          %s510 = sshll.u32 %s11, 4
          %s511 = int_to_ptr.hbm [resolvable:$true] %s510
          %s512 = sshll.u32 [#allocation10], 4
          %s513 = int_to_ptr.vmem [resolvable:$true] %s512
          %518 = dma.hbm_to_vmem [thread:$0]  %s511, 2048, %s513, [#allocation9], 128, 128, 8
        $region56: #{tpu_custom_call.1} parent=11 // pred_fallthru
          _
        // Predicated region
        $region57: #{tpu_custom_call.1} parent=11 // pred_check
          %p519 = pneg %p308
        $region58: #{tpu_custom_call.1} parent=11 // pred_check_branch
          %521 = sbr.rel (%p519) target = $region60
        $region59: #{tpu_custom_call.1} parent=11 // pred_region
          _
        $region60: #{tpu_custom_call.1} parent=11 // pred_fallthru
          _
        // Predicated region
        $region61: #{tpu_custom_call.1} parent=11 // pred_check
          %p522 = pneg %p329
        $region62: #{tpu_custom_call.1} parent=11 // pred_check_branch
          %524 = sbr.rel (%p522) target = $region64
        $region63: #{tpu_custom_call.1} parent=11 // pred_region
          %526 = vsyncadd [#allocation12], 0
          %s527 = sshll.u32 %s13, 4
          %s528 = int_to_ptr.hbm [resolvable:$true] %s527
          %s529 = sshll.u32 [#allocation11], 4
          %s530 = int_to_ptr.vmem [resolvable:$true] %s529
          %535 = dma.hbm_to_vmem [thread:$0]  %s528, 2048, %s530, [#allocation12], 128, 128, 8
        $region64: #{tpu_custom_call.1} parent=11 // pred_fallthru
          _
        // Predicated region
        $region65: #{tpu_custom_call.1} parent=11 // pred_check
          %p536 = pneg %p350
        $region66: #{tpu_custom_call.1} parent=11 // pred_check_branch
          %538 = sbr.rel (%p536) target = $region68
        $region67: #{tpu_custom_call.1} parent=11 // pred_region
          _
        $region68: #{tpu_custom_call.1} parent=11 // pred_fallthru
          _
        // Predicated region
        $region69: #{tpu_custom_call.1} parent=11 // pred_check
          %p539 = pneg %p371
        $region70: #{tpu_custom_call.1} parent=11 // pred_check_branch
          %541 = sbr.rel (%p539) target = $region72
        $region71: #{tpu_custom_call.1} parent=11 // pred_region
          %543 = vsyncadd [#allocation12], 0
          %s544 = sshll.u32 %s15, 4
          %s545 = int_to_ptr.hbm [resolvable:$true] %s544
          %s546 = sshll.u32 [#allocation13], 4
          %s547 = int_to_ptr.vmem [resolvable:$true] %s546
          %552 = dma.hbm_to_vmem [thread:$0]  %s545, 2048, %s547, [#allocation12], 128, 128, 8
        $region72: #{tpu_custom_call.1} parent=11 // pred_fallthru
          _
        // Predicated region
        $region73: #{tpu_custom_call.1} parent=11 // pred_check
          %p553 = pneg %p392
        $region74: #{tpu_custom_call.1} parent=11 // pred_check_branch
          %555 = sbr.rel (%p553) target = $region76
        $region75: #{tpu_custom_call.1} parent=11 // pred_region
          _
        $region76: #{tpu_custom_call.1} parent=11 // pred_fallthru
          _
      $region12: #{tpu_custom_call.1} parent=5 // pred_fallthru
        _
      %p556 = scmp.lt.s32.totalorder %s30, 2
      // Predicated region
      $region77: #{tpu_custom_call.1} parent=5 // pred_check
        %p557 = pneg %p556
      $region78: #{tpu_custom_call.1} parent=5 // pred_check_branch
        %559 = sbr.rel (%p557) target = $region80
      $region79: #{tpu_custom_call.1} parent=5 // pred_region
        // Predicated region
        $region81: #{tpu_custom_call.1} parent=79 // pred_check
          %p560 = pneg %p50
        $region82: #{tpu_custom_call.1} parent=79 // pred_check_branch
          %562 = sbr.rel (%p560) target = $region84
        $region83: #{tpu_custom_call.1} parent=79 // pred_region
          %s563 = smul.u32 16, %s30
          %p564 = scmp.lt.s32.totalorder %s563, 31
          %s565 = scalar_select %p564, %s563, 31
          %s566 = smul.addr %s565, 8
          %s567 = scalar_lea.vmem %s0, %s566
          %s568 = smul.u32 16, %s30
        $region84: #{tpu_custom_call.1} parent=79 // pred_fallthru
          _
      $region80: #{tpu_custom_call.1} parent=5 // pred_fallthru
        _
      %p569 = scmp.le.s32.totalorder 1, %s30
      %p570 = scmp.lt.s32.totalorder %s30, 3
      %p571 = pnand %p569, %p570
      %p572 = pneg %p571
      // Predicated region
      $region85: #{tpu_custom_call.1} parent=5 // pred_check
        _
      $region86: #{tpu_custom_call.1} parent=5 // pred_check_branch
        %574 = sbr.rel (%p571) target = $region88
      $region87: #{tpu_custom_call.1} parent=5 // pred_region
        %s575 = ssub.s32 %s30, 1
        // Predicated region
        $region89: #{tpu_custom_call.1} parent=87 // pred_check
          %p576 = pneg %p119
        $region90: #{tpu_custom_call.1} parent=87 // pred_check_branch
          %578 = sbr.rel (%p576) target = $region92
        $region91: #{tpu_custom_call.1} parent=87 // pred_region
          %580 = dma.done [#allocation3], 8192
        $region92: #{tpu_custom_call.1} parent=87 // pred_fallthru
          _
        // Predicated region
        $region93: #{tpu_custom_call.1} parent=87 // pred_check
          %p581 = pneg %p161
        $region94: #{tpu_custom_call.1} parent=87 // pred_check_branch
          %583 = sbr.rel (%p581) target = $region96
        $region95: #{tpu_custom_call.1} parent=87 // pred_region
          %585 = dma.done [#allocation6], 8192
        $region96: #{tpu_custom_call.1} parent=87 // pred_fallthru
          _
        // Predicated region
        $region97: #{tpu_custom_call.1} parent=87 // pred_check
          %p586 = pneg %p245
        $region98: #{tpu_custom_call.1} parent=87 // pred_check_branch
          %588 = sbr.rel (%p586) target = $region100
        $region99: #{tpu_custom_call.1} parent=87 // pred_region
          %590 = dma.done [#allocation6], 2048
        $region100: #{tpu_custom_call.1} parent=87 // pred_fallthru
          _
        // Predicated region
        $region101: #{tpu_custom_call.1} parent=87 // pred_check
          %p591 = pneg %p266
        $region102: #{tpu_custom_call.1} parent=87 // pred_check_branch
          %593 = sbr.rel (%p591) target = $region104
        $region103: #{tpu_custom_call.1} parent=87 // pred_region
          %595 = dma.done [#allocation9], 16
        $region104: #{tpu_custom_call.1} parent=87 // pred_fallthru
          _
        // Predicated region
        $region105: #{tpu_custom_call.1} parent=87 // pred_check
          %p596 = pneg %p287
        $region106: #{tpu_custom_call.1} parent=87 // pred_check_branch
          %598 = sbr.rel (%p596) target = $region108
        $region107: #{tpu_custom_call.1} parent=87 // pred_region
          %600 = dma.done [#allocation9], 2048
        $region108: #{tpu_custom_call.1} parent=87 // pred_fallthru
          _
        // Predicated region
        $region109: #{tpu_custom_call.1} parent=87 // pred_check
          %p601 = pneg %p329
        $region110: #{tpu_custom_call.1} parent=87 // pred_check_branch
          %603 = sbr.rel (%p601) target = $region112
        $region111: #{tpu_custom_call.1} parent=87 // pred_region
          %605 = dma.done [#allocation12], 2048
        $region112: #{tpu_custom_call.1} parent=87 // pred_fallthru
          _
        // Predicated region
        $region113: #{tpu_custom_call.1} parent=87 // pred_check
          %p606 = pneg %p371
        $region114: #{tpu_custom_call.1} parent=87 // pred_check_branch
          %608 = sbr.rel (%p606) target = $region116
        $region115: #{tpu_custom_call.1} parent=87 // pred_region
          %610 = dma.done [#allocation12], 2048
        $region116: #{tpu_custom_call.1} parent=87 // pred_fallthru
          _
        %s611 = smul.u32 16, %s35
        %p612 = scmp.lt.s32.totalorder %s611, 31
        %s613 = scalar_select %p612, %s611, 31
        %s614 = smul.addr %s613, 8
        %s615 = scalar_lea.vmem %s0, %s614
        %p616 = pneg %p56
        %p617 = pneg %p53
        %p618 = pneg %p77
        %p619 = pneg %p74
        %p620 = pneg %p98
        %p621 = pneg %p95
        %p622 = pneg %p119
        %p623 = pneg %p116
        %p624 = pneg %p140
        %p625 = pneg %p137
        %p626 = pneg %p161
        %p627 = pneg %p158
        %p628 = pneg %p182
        %p629 = pneg %p179
        %p630 = pneg %p203
        %p631 = pneg %p200
        %p632 = pneg %p224
        %p633 = pneg %p221
        %p634 = pneg %p245
        %p635 = pneg %p242
        %p636 = pneg %p266
        %p637 = pneg %p263
        %p638 = pneg %p287
        %p639 = pneg %p284
        %p640 = pneg %p308
        %p641 = pneg %p305
        %p642 = pneg %p329
        %p643 = pneg %p326
        %p644 = pneg %p350
        %p645 = pneg %p347
        %p646 = pneg %p371
        %p647 = pneg %p368
        %p648 = pneg %p392
        %p649 = pneg %p389
        %p650 = pneg %p418
        %p651 = pneg %p415
        %s652 = sand.u32 %s405, 1
        %s653 = scalar_lea.sflag [#allocation4], %s652
        %s654 = sand.u32 %s405, 1
        %s655 = smul.addr %s654, 128
        %s656 = scalar_lea.vmem [#allocation14], %s655
        %s657 = smul.u32 16, %s35
        %p658 = scmp.lt.s32.totalorder %s657, 31
        %s659 = scalar_select %p658, %s657, 31
        %s660 = smul.addr %s659, 8
        %s661 = scalar_lea.vmem %s0, %s660
        %s662 = smul.u32 16, %s35
        %s663 = smul.u32 16, %s35
        %v664 = vld [vmem:[%s661] sm:$0xff]
        %v665 = vld [vmem:[%s661 + $0x8] sm:$0xff]
        %v666 = vld [vmem:[%s661 + $0x10] sm:$0xff]
        %v667 = vld [vmem:[%s661 + $0x18] sm:$0xff]
        %v668 = vld [vmem:[%s661 + $0x20] sm:$0xff]
        %v669 = vld [vmem:[%s661 + $0x28] sm:$0xff]
        %v670 = vld [vmem:[%s661 + $0x30] sm:$0xff]
        %v671 = vld [vmem:[%s661 + $0x38] sm:$0xff]
        %v672 = vld [vmem:[%s661 + $0x40] sm:$0xff]
        %v673 = vld [vmem:[%s661 + $0x48] sm:$0xff]
        %v674 = vld [vmem:[%s661 + $0x50] sm:$0xff]
        %v675 = vld [vmem:[%s661 + $0x58] sm:$0xff]
        %v676 = vld [vmem:[%s661 + $0x60] sm:$0xff]
        %v677 = vld [vmem:[%s661 + $0x68] sm:$0xff]
        %v678 = vld [vmem:[%s661 + $0x70] sm:$0xff]
        %v679 = vld [vmem:[%s661 + $0x78] sm:$0xff]
        %v680 = vld [vmem:[%s1] sm:$0xff]
        %v681 = vld [vmem:[%s1 + $0x8] sm:$0xff]
        %v682 = vld [vmem:[%s1 + $0x10] sm:$0xff]
        %v683 = vld [vmem:[%s1 + $0x18] sm:$0xff]
        %v684 = vld [vmem:[%s2] sm:$0x3]
        %v686 = vperm.slane %v684, 0
        %v687 = vperm.slane %v684, 1
        %vm690 = vcmask 130048
        %v692 = vsel %vm690, %v664, 0
        %v695 = vsel %vm690, %v665, 0
        %v698 = vsel %vm690, %v666, 0
        %v701 = vsel %vm690, %v667, 0
        %v704 = vsel %vm690, %v668, 0
        %v707 = vsel %vm690, %v669, 0
        %v710 = vsel %vm690, %v670, 0
        %v713 = vsel %vm690, %v671, 0
        %v716 = vsel %vm690, %v672, 0
        %v719 = vsel %vm690, %v673, 0
        %v722 = vsel %vm690, %v674, 0
        %v725 = vsel %vm690, %v675, 0
        %v728 = vsel %vm690, %v676, 0
        %v731 = vsel %vm690, %v677, 0
        %v734 = vsel %vm690, %v678, 0
        %v737 = vsel %vm690, %v679, 0
        %739 = vmatpush.msra.mxu0 0.0
        %740 = vmatpush.msra.mxu0 0.0
        %741 = vmatpush.msra.mxu0 0.0
        %742 = vmatpush.msra.mxu0 0.0
        %743 = vmatpush.msra.mxu0 0.0
        %744 = vmatpush.msra.mxu0 0.0
        %745 = vmatpush.msra.mxu0 0.0
        %746 = vmatpush.msra.mxu0 0.0
        %747 = vmatpush.msra.mxu0 0.0
        %748 = vmatpush.msra.mxu0 0.0
        %749 = vmatpush.msra.mxu0 0.0
        %750 = vmatpush.msra.mxu0 0.0
        %751 = vmatpush.msra.mxu0 0.0
        %752 = vmatpush.msra.mxu0 0.0
        %753 = vmatpush.msra.mxu0 %v682
        %754 = vmatpush.msra.mxu0 %v680
        %755 = vmatmul.f32.gmra.mxu0 %v692
        %v756 = vpop.f32.mrf.mxu0
        %v757 = vadd.f32 %v686, %v756
        %758 = vmatmul.f32.gmra.mxu0 %v695
        %v759 = vpop.f32.mrf.mxu0
        %v760 = vadd.f32 %v686, %v759
        %761 = vmatmul.f32.gmra.mxu0 %v698
        %v762 = vpop.f32.mrf.mxu0
        %v763 = vadd.f32 %v686, %v762
        %764 = vmatmul.f32.gmra.mxu0 %v701
        %v765 = vpop.f32.mrf.mxu0
        %v766 = vadd.f32 %v686, %v765
        %767 = vmatmul.f32.gmra.mxu0 %v704
        %v768 = vpop.f32.mrf.mxu0
        %v769 = vadd.f32 %v686, %v768
        %770 = vmatmul.f32.gmra.mxu0 %v707
        %v771 = vpop.f32.mrf.mxu0
        %v772 = vadd.f32 %v686, %v771
        %773 = vmatmul.f32.gmra.mxu0 %v710
        %v774 = vpop.f32.mrf.mxu0
        %v775 = vadd.f32 %v686, %v774
        %776 = vmatmul.f32.gmra.mxu0 %v713
        %v777 = vpop.f32.mrf.mxu0
        %v778 = vadd.f32 %v686, %v777
        %779 = vmatmul.f32.gmra.mxu0 %v716
        %v780 = vpop.f32.mrf.mxu0
        %v781 = vadd.f32 %v686, %v780
        %782 = vmatmul.f32.gmra.mxu0 %v719
        %v783 = vpop.f32.mrf.mxu0
        %v784 = vadd.f32 %v686, %v783
        %785 = vmatmul.f32.gmra.mxu0 %v722
        %v786 = vpop.f32.mrf.mxu0
        %v787 = vadd.f32 %v686, %v786
        %788 = vmatmul.f32.gmra.mxu0 %v725
        %v789 = vpop.f32.mrf.mxu0
        %v790 = vadd.f32 %v686, %v789
        %791 = vmatmul.f32.gmra.mxu0 %v728
        %v792 = vpop.f32.mrf.mxu0
        %v793 = vadd.f32 %v686, %v792
        %794 = vmatmul.f32.gmra.mxu0 %v731
        %v795 = vpop.f32.mrf.mxu0
        %v796 = vadd.f32 %v686, %v795
        %797 = vmatmul.f32.gmra.mxu0 %v734
        %v798 = vpop.f32.mrf.mxu0
        %v799 = vadd.f32 %v686, %v798
        %800 = vmatmul.f32.gmra.mxu0 %v737
        %v801 = vpop.f32.mrf.mxu0
        %v802 = vadd.f32 %v686, %v801
        %803 = vdwg.mxu0
        %804 = vmatpush.msra.mxu0 0.0
        %805 = vmatpush.msra.mxu0 0.0
        %806 = vmatpush.msra.mxu0 0.0
        %807 = vmatpush.msra.mxu0 0.0
        %808 = vmatpush.msra.mxu0 0.0
        %809 = vmatpush.msra.mxu0 0.0
        %810 = vmatpush.msra.mxu0 0.0
        %811 = vmatpush.msra.mxu0 0.0
        %812 = vmatpush.msra.mxu0 0.0
        %813 = vmatpush.msra.mxu0 0.0
        %814 = vmatpush.msra.mxu0 0.0
        %815 = vmatpush.msra.mxu0 0.0
        %816 = vmatpush.msra.mxu0 0.0
        %817 = vmatpush.msra.mxu0 0.0
        %818 = vmatpush.msra.mxu0 %v683
        %819 = vmatpush.msra.mxu0 %v681
        %820 = vmatmul.f32.gmra.mxu0 %v692
        %v821 = vpop.f32.mrf.mxu0
        %v822 = vadd.f32 %v687, %v821
        %823 = vmatmul.f32.gmra.mxu0 %v695
        %v824 = vpop.f32.mrf.mxu0
        %v825 = vadd.f32 %v687, %v824
        %826 = vmatmul.f32.gmra.mxu0 %v698
        %v827 = vpop.f32.mrf.mxu0
        %v828 = vadd.f32 %v687, %v827
        %829 = vmatmul.f32.gmra.mxu0 %v701
        %v830 = vpop.f32.mrf.mxu0
        %v831 = vadd.f32 %v687, %v830
        %832 = vmatmul.f32.gmra.mxu0 %v704
        %v833 = vpop.f32.mrf.mxu0
        %v834 = vadd.f32 %v687, %v833
        %835 = vmatmul.f32.gmra.mxu0 %v707
        %v836 = vpop.f32.mrf.mxu0
        %v837 = vadd.f32 %v687, %v836
        %838 = vmatmul.f32.gmra.mxu0 %v710
        %v839 = vpop.f32.mrf.mxu0
        %v840 = vadd.f32 %v687, %v839
        %841 = vmatmul.f32.gmra.mxu0 %v713
        %v842 = vpop.f32.mrf.mxu0
        %v843 = vadd.f32 %v687, %v842
        %844 = vmatmul.f32.gmra.mxu0 %v716
        %v845 = vpop.f32.mrf.mxu0
        %v846 = vadd.f32 %v687, %v845
        %847 = vmatmul.f32.gmra.mxu0 %v719
        %v848 = vpop.f32.mrf.mxu0
        %v849 = vadd.f32 %v687, %v848
        %850 = vmatmul.f32.gmra.mxu0 %v722
        %v851 = vpop.f32.mrf.mxu0
        %v852 = vadd.f32 %v687, %v851
        %853 = vmatmul.f32.gmra.mxu0 %v725
        %v854 = vpop.f32.mrf.mxu0
        %v855 = vadd.f32 %v687, %v854
        %856 = vmatmul.f32.gmra.mxu0 %v728
        %v857 = vpop.f32.mrf.mxu0
        %v858 = vadd.f32 %v687, %v857
        %859 = vmatmul.f32.gmra.mxu0 %v731
        %v860 = vpop.f32.mrf.mxu0
        %v861 = vadd.f32 %v687, %v860
        %862 = vmatmul.f32.gmra.mxu0 %v734
        %v863 = vpop.f32.mrf.mxu0
        %v864 = vadd.f32 %v687, %v863
        %865 = vmatmul.f32.gmra.mxu0 %v737
        %v866 = vpop.f32.mrf.mxu0
        %v867 = vadd.f32 %v687, %v866
        %868 = vdwg.mxu0
        %v869 = vmax.f32 %v757, 0.0
        %v870 = vmax.f32 %v822, 0.0
        %v871 = vmax.f32 %v760, 0.0
        %v872 = vmax.f32 %v825, 0.0
        %v873 = vmax.f32 %v763, 0.0
        %v874 = vmax.f32 %v828, 0.0
        %v875 = vmax.f32 %v766, 0.0
        %v876 = vmax.f32 %v831, 0.0
        %v877 = vmax.f32 %v769, 0.0
        %v878 = vmax.f32 %v834, 0.0
        %v879 = vmax.f32 %v772, 0.0
        %v880 = vmax.f32 %v837, 0.0
        %v881 = vmax.f32 %v775, 0.0
        %v882 = vmax.f32 %v840, 0.0
        %v883 = vmax.f32 %v778, 0.0
        %v884 = vmax.f32 %v843, 0.0
        %v885 = vmax.f32 %v781, 0.0
        %v886 = vmax.f32 %v846, 0.0
        %v887 = vmax.f32 %v784, 0.0
        %v888 = vmax.f32 %v849, 0.0
        %v889 = vmax.f32 %v787, 0.0
        %v890 = vmax.f32 %v852, 0.0
        %v891 = vmax.f32 %v790, 0.0
        %v892 = vmax.f32 %v855, 0.0
        %v893 = vmax.f32 %v793, 0.0
        %v894 = vmax.f32 %v858, 0.0
        %v895 = vmax.f32 %v796, 0.0
        %v896 = vmax.f32 %v861, 0.0
        %v897 = vmax.f32 %v799, 0.0
        %v898 = vmax.f32 %v864, 0.0
        %v899 = vmax.f32 %v802, 0.0
        %v900 = vmax.f32 %v867, 0.0
        %v901 = vld [vmem:[#allocation2] sm:$0xff]
        %v902 = vld [vmem:[#allocation2 + $0x8] sm:$0xff]
        %v903 = vld [vmem:[#allocation2 + $0x10] sm:$0xff]
        %v904 = vld [vmem:[#allocation2 + $0x18] sm:$0xff]
        %v905 = vld [vmem:[#allocation2 + $0x20] sm:$0xff]
        %v906 = vld [vmem:[#allocation2 + $0x28] sm:$0xff]
        %v907 = vld [vmem:[#allocation2 + $0x30] sm:$0xff]
        %v908 = vld [vmem:[#allocation2 + $0x38] sm:$0xff]
        %v909 = vld [vmem:[#allocation2 + $0x40] sm:$0xff]
        %v910 = vld [vmem:[#allocation2 + $0x48] sm:$0xff]
        %v911 = vld [vmem:[#allocation2 + $0x50] sm:$0xff]
        %v912 = vld [vmem:[#allocation2 + $0x58] sm:$0xff]
        %v913 = vld [vmem:[#allocation2 + $0x60] sm:$0xff]
        %v914 = vld [vmem:[#allocation2 + $0x68] sm:$0xff]
        %v915 = vld [vmem:[#allocation2 + $0x70] sm:$0xff]
        %v916 = vld [vmem:[#allocation2 + $0x78] sm:$0xff]
        %v917 = vld [vmem:[#allocation2 + $0x80] sm:$0xff]
        %v918 = vld [vmem:[#allocation2 + $0x88] sm:$0xff]
        %v919 = vld [vmem:[#allocation2 + $0x90] sm:$0xff]
        %v920 = vld [vmem:[#allocation2 + $0x98] sm:$0xff]
        %v921 = vld [vmem:[#allocation2 + $0xa0] sm:$0xff]
        %v922 = vld [vmem:[#allocation2 + $0xa8] sm:$0xff]
        %v923 = vld [vmem:[#allocation2 + $0xb0] sm:$0xff]
        %v924 = vld [vmem:[#allocation2 + $0xb8] sm:$0xff]
        %v925 = vld [vmem:[#allocation2 + $0xc0] sm:$0xff]
        %v926 = vld [vmem:[#allocation2 + $0xc8] sm:$0xff]
        %v927 = vld [vmem:[#allocation2 + $0xd0] sm:$0xff]
        %v928 = vld [vmem:[#allocation2 + $0xd8] sm:$0xff]
        %v929 = vld [vmem:[#allocation2 + $0xe0] sm:$0xff]
        %v930 = vld [vmem:[#allocation2 + $0xe8] sm:$0xff]
        %v931 = vld [vmem:[#allocation2 + $0xf0] sm:$0xff]
        %v932 = vld [vmem:[#allocation2 + $0xf8] sm:$0xff]
        %v933 = vld [vmem:[#allocation2 + $0x100] sm:$0xff]
        %v934 = vld [vmem:[#allocation2 + $0x108] sm:$0xff]
        %v935 = vld [vmem:[#allocation2 + $0x110] sm:$0xff]
        %v936 = vld [vmem:[#allocation2 + $0x118] sm:$0xff]
        %v937 = vld [vmem:[#allocation2 + $0x120] sm:$0xff]
        %v938 = vld [vmem:[#allocation2 + $0x128] sm:$0xff]
        %v939 = vld [vmem:[#allocation2 + $0x130] sm:$0xff]
        %v940 = vld [vmem:[#allocation2 + $0x138] sm:$0xff]
        %v941 = vld [vmem:[#allocation2 + $0x140] sm:$0xff]
        %v942 = vld [vmem:[#allocation2 + $0x148] sm:$0xff]
        %v943 = vld [vmem:[#allocation2 + $0x150] sm:$0xff]
        %v944 = vld [vmem:[#allocation2 + $0x158] sm:$0xff]
        %v945 = vld [vmem:[#allocation2 + $0x160] sm:$0xff]
        %v946 = vld [vmem:[#allocation2 + $0x168] sm:$0xff]
        %v947 = vld [vmem:[#allocation2 + $0x170] sm:$0xff]
        %v948 = vld [vmem:[#allocation2 + $0x178] sm:$0xff]
        %v949 = vld [vmem:[#allocation2 + $0x180] sm:$0xff]
        %v950 = vld [vmem:[#allocation2 + $0x188] sm:$0xff]
        %v951 = vld [vmem:[#allocation2 + $0x190] sm:$0xff]
        %v952 = vld [vmem:[#allocation2 + $0x198] sm:$0xff]
        %v953 = vld [vmem:[#allocation2 + $0x1a0] sm:$0xff]
        %v954 = vld [vmem:[#allocation2 + $0x1a8] sm:$0xff]
        %v955 = vld [vmem:[#allocation2 + $0x1b0] sm:$0xff]
        %v956 = vld [vmem:[#allocation2 + $0x1b8] sm:$0xff]
        %v957 = vld [vmem:[#allocation2 + $0x1c0] sm:$0xff]
        %v958 = vld [vmem:[#allocation2 + $0x1c8] sm:$0xff]
        %v959 = vld [vmem:[#allocation2 + $0x1d0] sm:$0xff]
        %v960 = vld [vmem:[#allocation2 + $0x1d8] sm:$0xff]
        %v961 = vld [vmem:[#allocation2 + $0x1e0] sm:$0xff]
        %v962 = vld [vmem:[#allocation2 + $0x1e8] sm:$0xff]
        %v963 = vld [vmem:[#allocation2 + $0x1f0] sm:$0xff]
        %v964 = vld [vmem:[#allocation2 + $0x1f8] sm:$0xff]
        %v965 = vld [vmem:[%s4] sm:$0x3]
        %v967 = vperm.slane %v965, 0
        %v968 = vperm.slane %v965, 1
        %971 = vmatpush.msra.mxu0 %v931
        %972 = vmatpush.msra.mxu0 %v929
        %973 = vmatpush.msra.mxu0 %v927
        %974 = vmatpush.msra.mxu0 %v925
        %975 = vmatpush.msra.mxu0 %v923
        %976 = vmatpush.msra.mxu0 %v921
        %977 = vmatpush.msra.mxu0 %v919
        %978 = vmatpush.msra.mxu0 %v917
        %979 = vmatpush.msra.mxu0 %v915
        %980 = vmatpush.msra.mxu0 %v913
        %981 = vmatpush.msra.mxu0 %v911
        %982 = vmatpush.msra.mxu0 %v909
        %983 = vmatpush.msra.mxu0 %v907
        %984 = vmatpush.msra.mxu0 %v905
        %985 = vmatpush.msra.mxu0 %v903
        %986 = vmatpush.msra.mxu0 %v901
        %987 = vmatmul.f32.gmra.mxu0 %v869
        %v988 = vpop.f32.mrf.mxu0
        %v989 = vadd.f32 %v967, %v988
        %990 = vmatmul.f32.gmra.mxu0 %v871
        %v991 = vpop.f32.mrf.mxu0
        %v992 = vadd.f32 %v967, %v991
        %993 = vmatmul.f32.gmra.mxu0 %v873
        %v994 = vpop.f32.mrf.mxu0
        %v995 = vadd.f32 %v967, %v994
        %996 = vmatmul.f32.gmra.mxu0 %v875
        %v997 = vpop.f32.mrf.mxu0
        %v998 = vadd.f32 %v967, %v997
        %999 = vmatmul.f32.gmra.mxu0 %v877
        %v1000 = vpop.f32.mrf.mxu0
        %v1001 = vadd.f32 %v967, %v1000
        %1002 = vmatmul.f32.gmra.mxu0 %v879
        %v1003 = vpop.f32.mrf.mxu0
        %v1004 = vadd.f32 %v967, %v1003
        %1005 = vmatmul.f32.gmra.mxu0 %v881
        %v1006 = vpop.f32.mrf.mxu0
        %v1007 = vadd.f32 %v967, %v1006
        %1008 = vmatmul.f32.gmra.mxu0 %v883
        %v1009 = vpop.f32.mrf.mxu0
        %v1010 = vadd.f32 %v967, %v1009
        %1011 = vmatmul.f32.gmra.mxu0 %v885
        %v1012 = vpop.f32.mrf.mxu0
        %v1013 = vadd.f32 %v967, %v1012
        %1014 = vmatmul.f32.gmra.mxu0 %v887
        %v1015 = vpop.f32.mrf.mxu0
        %v1016 = vadd.f32 %v967, %v1015
        %1017 = vmatmul.f32.gmra.mxu0 %v889
        %v1018 = vpop.f32.mrf.mxu0
        %v1019 = vadd.f32 %v967, %v1018
        %1020 = vmatmul.f32.gmra.mxu0 %v891
        %v1021 = vpop.f32.mrf.mxu0
        %v1022 = vadd.f32 %v967, %v1021
        %1023 = vmatmul.f32.gmra.mxu0 %v893
        %v1024 = vpop.f32.mrf.mxu0
        %v1025 = vadd.f32 %v967, %v1024
        %1026 = vmatmul.f32.gmra.mxu0 %v895
        %v1027 = vpop.f32.mrf.mxu0
        %v1028 = vadd.f32 %v967, %v1027
        %1029 = vmatmul.f32.gmra.mxu0 %v897
        %v1030 = vpop.f32.mrf.mxu0
        %v1031 = vadd.f32 %v967, %v1030
        %1032 = vmatmul.f32.gmra.mxu0 %v899
        %v1033 = vpop.f32.mrf.mxu0
        %v1034 = vadd.f32 %v967, %v1033
        %1035 = vdwg.mxu0
        %1036 = vmatpush.msra.mxu0 %v963
        %1037 = vmatpush.msra.mxu0 %v961
        %1038 = vmatpush.msra.mxu0 %v959
        %1039 = vmatpush.msra.mxu0 %v957
        %1040 = vmatpush.msra.mxu0 %v955
        %1041 = vmatpush.msra.mxu0 %v953
        %1042 = vmatpush.msra.mxu0 %v951
        %1043 = vmatpush.msra.mxu0 %v949
        %1044 = vmatpush.msra.mxu0 %v947
        %1045 = vmatpush.msra.mxu0 %v945
        %1046 = vmatpush.msra.mxu0 %v943
        %1047 = vmatpush.msra.mxu0 %v941
        %1048 = vmatpush.msra.mxu0 %v939
        %1049 = vmatpush.msra.mxu0 %v937
        %1050 = vmatpush.msra.mxu0 %v935
        %1051 = vmatpush.msra.mxu0 %v933
        %1052 = vmatmul.f32.gmra.mxu0 %v870
        %v1053 = vpop.f32.mrf.mxu0
        %v1054 = vadd.f32 %v989, %v1053
        %1055 = vmatmul.f32.gmra.mxu0 %v872
        %v1056 = vpop.f32.mrf.mxu0
        %v1057 = vadd.f32 %v992, %v1056
        %1058 = vmatmul.f32.gmra.mxu0 %v874
        %v1059 = vpop.f32.mrf.mxu0
        %v1060 = vadd.f32 %v995, %v1059
        %1061 = vmatmul.f32.gmra.mxu0 %v876
        %v1062 = vpop.f32.mrf.mxu0
        %v1063 = vadd.f32 %v998, %v1062
        %1064 = vmatmul.f32.gmra.mxu0 %v878
        %v1065 = vpop.f32.mrf.mxu0
        %v1066 = vadd.f32 %v1001, %v1065
        %1067 = vmatmul.f32.gmra.mxu0 %v880
        %v1068 = vpop.f32.mrf.mxu0
        %v1069 = vadd.f32 %v1004, %v1068
        %1070 = vmatmul.f32.gmra.mxu0 %v882
        %v1071 = vpop.f32.mrf.mxu0
        %v1072 = vadd.f32 %v1007, %v1071
        %1073 = vmatmul.f32.gmra.mxu0 %v884
        %v1074 = vpop.f32.mrf.mxu0
        %v1075 = vadd.f32 %v1010, %v1074
        %1076 = vmatmul.f32.gmra.mxu0 %v886
        %v1077 = vpop.f32.mrf.mxu0
        %v1078 = vadd.f32 %v1013, %v1077
        %1079 = vmatmul.f32.gmra.mxu0 %v888
        %v1080 = vpop.f32.mrf.mxu0
        %v1081 = vadd.f32 %v1016, %v1080
        %1082 = vmatmul.f32.gmra.mxu0 %v890
        %v1083 = vpop.f32.mrf.mxu0
        %v1084 = vadd.f32 %v1019, %v1083
        %1085 = vmatmul.f32.gmra.mxu0 %v892
        %v1086 = vpop.f32.mrf.mxu0
        %v1087 = vadd.f32 %v1022, %v1086
        %1088 = vmatmul.f32.gmra.mxu0 %v894
        %v1089 = vpop.f32.mrf.mxu0
        %v1090 = vadd.f32 %v1025, %v1089
        %1091 = vmatmul.f32.gmra.mxu0 %v896
        %v1092 = vpop.f32.mrf.mxu0
        %v1093 = vadd.f32 %v1028, %v1092
        %1094 = vmatmul.f32.gmra.mxu0 %v898
        %v1095 = vpop.f32.mrf.mxu0
        %v1096 = vadd.f32 %v1031, %v1095
        %1097 = vmatmul.f32.gmra.mxu0 %v900
        %v1098 = vpop.f32.mrf.mxu0
        %v1099 = vadd.f32 %v1034, %v1098
        %1100 = vdwg.mxu0
        %1101 = vmatpush.msra.mxu0 %v932
        %1102 = vmatpush.msra.mxu0 %v930
        %1103 = vmatpush.msra.mxu0 %v928
        %1104 = vmatpush.msra.mxu0 %v926
        %1105 = vmatpush.msra.mxu0 %v924
        %1106 = vmatpush.msra.mxu0 %v922
        %1107 = vmatpush.msra.mxu0 %v920
        %1108 = vmatpush.msra.mxu0 %v918
        %1109 = vmatpush.msra.mxu0 %v916
        %1110 = vmatpush.msra.mxu0 %v914
        %1111 = vmatpush.msra.mxu0 %v912
        %1112 = vmatpush.msra.mxu0 %v910
        %1113 = vmatpush.msra.mxu0 %v908
        %1114 = vmatpush.msra.mxu0 %v906
        %1115 = vmatpush.msra.mxu0 %v904
        %1116 = vmatpush.msra.mxu0 %v902
        %1117 = vmatmul.f32.gmra.mxu0 %v869
        %v1118 = vpop.f32.mrf.mxu0
        %v1119 = vadd.f32 %v968, %v1118
        %1120 = vmatmul.f32.gmra.mxu0 %v871
        %v1121 = vpop.f32.mrf.mxu0
        %v1122 = vadd.f32 %v968, %v1121
        %1123 = vmatmul.f32.gmra.mxu0 %v873
        %v1124 = vpop.f32.mrf.mxu0
        %v1125 = vadd.f32 %v968, %v1124
        %1126 = vmatmul.f32.gmra.mxu0 %v875
        %v1127 = vpop.f32.mrf.mxu0
        %v1128 = vadd.f32 %v968, %v1127
        %1129 = vmatmul.f32.gmra.mxu0 %v877
        %v1130 = vpop.f32.mrf.mxu0
        %v1131 = vadd.f32 %v968, %v1130
        %1132 = vmatmul.f32.gmra.mxu0 %v879
        %v1133 = vpop.f32.mrf.mxu0
        %v1134 = vadd.f32 %v968, %v1133
        %1135 = vmatmul.f32.gmra.mxu0 %v881
        %v1136 = vpop.f32.mrf.mxu0
        %v1137 = vadd.f32 %v968, %v1136
        %1138 = vmatmul.f32.gmra.mxu0 %v883
        %v1139 = vpop.f32.mrf.mxu0
        %v1140 = vadd.f32 %v968, %v1139
        %1141 = vmatmul.f32.gmra.mxu0 %v885
        %v1142 = vpop.f32.mrf.mxu0
        %v1143 = vadd.f32 %v968, %v1142
        %1144 = vmatmul.f32.gmra.mxu0 %v887
        %v1145 = vpop.f32.mrf.mxu0
        %v1146 = vadd.f32 %v968, %v1145
        %1147 = vmatmul.f32.gmra.mxu0 %v889
        %v1148 = vpop.f32.mrf.mxu0
        %v1149 = vadd.f32 %v968, %v1148
        %1150 = vmatmul.f32.gmra.mxu0 %v891
        %v1151 = vpop.f32.mrf.mxu0
        %v1152 = vadd.f32 %v968, %v1151
        %1153 = vmatmul.f32.gmra.mxu0 %v893
        %v1154 = vpop.f32.mrf.mxu0
        %v1155 = vadd.f32 %v968, %v1154
        %1156 = vmatmul.f32.gmra.mxu0 %v895
        %v1157 = vpop.f32.mrf.mxu0
        %v1158 = vadd.f32 %v968, %v1157
        %1159 = vmatmul.f32.gmra.mxu0 %v897
        %v1160 = vpop.f32.mrf.mxu0
        %v1161 = vadd.f32 %v968, %v1160
        %1162 = vmatmul.f32.gmra.mxu0 %v899
        %v1163 = vpop.f32.mrf.mxu0
        %v1164 = vadd.f32 %v968, %v1163
        %1165 = vdwg.mxu0
        %1166 = vmatpush.msra.mxu0 %v964
        %1167 = vmatpush.msra.mxu0 %v962
        %1168 = vmatpush.msra.mxu0 %v960
        %1169 = vmatpush.msra.mxu0 %v958
        %1170 = vmatpush.msra.mxu0 %v956
        %1171 = vmatpush.msra.mxu0 %v954
        %1172 = vmatpush.msra.mxu0 %v952
        %1173 = vmatpush.msra.mxu0 %v950
        %1174 = vmatpush.msra.mxu0 %v948
        %1175 = vmatpush.msra.mxu0 %v946
        %1176 = vmatpush.msra.mxu0 %v944
        %1177 = vmatpush.msra.mxu0 %v942
        %1178 = vmatpush.msra.mxu0 %v940
        %1179 = vmatpush.msra.mxu0 %v938
        %1180 = vmatpush.msra.mxu0 %v936
        %1181 = vmatpush.msra.mxu0 %v934
        %1182 = vmatmul.f32.gmra.mxu0 %v870
        %v1183 = vpop.f32.mrf.mxu0
        %v1184 = vadd.f32 %v1119, %v1183
        %1185 = vmatmul.f32.gmra.mxu0 %v872
        %v1186 = vpop.f32.mrf.mxu0
        %v1187 = vadd.f32 %v1122, %v1186
        %1188 = vmatmul.f32.gmra.mxu0 %v874
        %v1189 = vpop.f32.mrf.mxu0
        %v1190 = vadd.f32 %v1125, %v1189
        %1191 = vmatmul.f32.gmra.mxu0 %v876
        %v1192 = vpop.f32.mrf.mxu0
        %v1193 = vadd.f32 %v1128, %v1192
        %1194 = vmatmul.f32.gmra.mxu0 %v878
        %v1195 = vpop.f32.mrf.mxu0
        %v1196 = vadd.f32 %v1131, %v1195
        %1197 = vmatmul.f32.gmra.mxu0 %v880
        %v1198 = vpop.f32.mrf.mxu0
        %v1199 = vadd.f32 %v1134, %v1198
        %1200 = vmatmul.f32.gmra.mxu0 %v882
        %v1201 = vpop.f32.mrf.mxu0
        %v1202 = vadd.f32 %v1137, %v1201
        %1203 = vmatmul.f32.gmra.mxu0 %v884
        %v1204 = vpop.f32.mrf.mxu0
        %v1205 = vadd.f32 %v1140, %v1204
        %1206 = vmatmul.f32.gmra.mxu0 %v886
        %v1207 = vpop.f32.mrf.mxu0
        %v1208 = vadd.f32 %v1143, %v1207
        %1209 = vmatmul.f32.gmra.mxu0 %v888
        %v1210 = vpop.f32.mrf.mxu0
        %v1211 = vadd.f32 %v1146, %v1210
        %1212 = vmatmul.f32.gmra.mxu0 %v890
        %v1213 = vpop.f32.mrf.mxu0
        %v1214 = vadd.f32 %v1149, %v1213
        %1215 = vmatmul.f32.gmra.mxu0 %v892
        %v1216 = vpop.f32.mrf.mxu0
        %v1217 = vadd.f32 %v1152, %v1216
        %1218 = vmatmul.f32.gmra.mxu0 %v894
        %v1219 = vpop.f32.mrf.mxu0
        %v1220 = vadd.f32 %v1155, %v1219
        %1221 = vmatmul.f32.gmra.mxu0 %v896
        %v1222 = vpop.f32.mrf.mxu0
        %v1223 = vadd.f32 %v1158, %v1222
        %1224 = vmatmul.f32.gmra.mxu0 %v898
        %v1225 = vpop.f32.mrf.mxu0
        %v1226 = vadd.f32 %v1161, %v1225
        %1227 = vmatmul.f32.gmra.mxu0 %v900
        %v1228 = vpop.f32.mrf.mxu0
        %v1229 = vadd.f32 %v1164, %v1228
        %1230 = vdwg.mxu0
        %v1231 = vmax.f32 %v1054, 0.0
        %v1232 = vmax.f32 %v1184, 0.0
        %v1233 = vmax.f32 %v1057, 0.0
        %v1234 = vmax.f32 %v1187, 0.0
        %v1235 = vmax.f32 %v1060, 0.0
        %v1236 = vmax.f32 %v1190, 0.0
        %v1237 = vmax.f32 %v1063, 0.0
        %v1238 = vmax.f32 %v1193, 0.0
        %v1239 = vmax.f32 %v1066, 0.0
        %v1240 = vmax.f32 %v1196, 0.0
        %v1241 = vmax.f32 %v1069, 0.0
        %v1242 = vmax.f32 %v1199, 0.0
        %v1243 = vmax.f32 %v1072, 0.0
        %v1244 = vmax.f32 %v1202, 0.0
        %v1245 = vmax.f32 %v1075, 0.0
        %v1246 = vmax.f32 %v1205, 0.0
        %v1247 = vmax.f32 %v1078, 0.0
        %v1248 = vmax.f32 %v1208, 0.0
        %v1249 = vmax.f32 %v1081, 0.0
        %v1250 = vmax.f32 %v1211, 0.0
        %v1251 = vmax.f32 %v1084, 0.0
        %v1252 = vmax.f32 %v1214, 0.0
        %v1253 = vmax.f32 %v1087, 0.0
        %v1254 = vmax.f32 %v1217, 0.0
        %v1255 = vmax.f32 %v1090, 0.0
        %v1256 = vmax.f32 %v1220, 0.0
        %v1257 = vmax.f32 %v1093, 0.0
        %v1258 = vmax.f32 %v1223, 0.0
        %v1259 = vmax.f32 %v1096, 0.0
        %v1260 = vmax.f32 %v1226, 0.0
        %v1261 = vmax.f32 %v1099, 0.0
        %v1262 = vmax.f32 %v1229, 0.0
        %v1263 = vld [vmem:[#allocation5] sm:$0xff]
        %v1264 = vld [vmem:[#allocation5 + $0x8] sm:$0xff]
        %v1265 = vld [vmem:[#allocation5 + $0x10] sm:$0xff]
        %v1266 = vld [vmem:[#allocation5 + $0x18] sm:$0xff]
        %v1267 = vld [vmem:[#allocation5 + $0x20] sm:$0xff]
        %v1268 = vld [vmem:[#allocation5 + $0x28] sm:$0xff]
        %v1269 = vld [vmem:[#allocation5 + $0x30] sm:$0xff]
        %v1270 = vld [vmem:[#allocation5 + $0x38] sm:$0xff]
        %v1271 = vld [vmem:[#allocation5 + $0x40] sm:$0xff]
        %v1272 = vld [vmem:[#allocation5 + $0x48] sm:$0xff]
        %v1273 = vld [vmem:[#allocation5 + $0x50] sm:$0xff]
        %v1274 = vld [vmem:[#allocation5 + $0x58] sm:$0xff]
        %v1275 = vld [vmem:[#allocation5 + $0x60] sm:$0xff]
        %v1276 = vld [vmem:[#allocation5 + $0x68] sm:$0xff]
        %v1277 = vld [vmem:[#allocation5 + $0x70] sm:$0xff]
        %v1278 = vld [vmem:[#allocation5 + $0x78] sm:$0xff]
        %v1279 = vld [vmem:[#allocation5 + $0x80] sm:$0xff]
        %v1280 = vld [vmem:[#allocation5 + $0x88] sm:$0xff]
        %v1281 = vld [vmem:[#allocation5 + $0x90] sm:$0xff]
        %v1282 = vld [vmem:[#allocation5 + $0x98] sm:$0xff]
        %v1283 = vld [vmem:[#allocation5 + $0xa0] sm:$0xff]
        %v1284 = vld [vmem:[#allocation5 + $0xa8] sm:$0xff]
        %v1285 = vld [vmem:[#allocation5 + $0xb0] sm:$0xff]
        %v1286 = vld [vmem:[#allocation5 + $0xb8] sm:$0xff]
        %v1287 = vld [vmem:[#allocation5 + $0xc0] sm:$0xff]
        %v1288 = vld [vmem:[#allocation5 + $0xc8] sm:$0xff]
        %v1289 = vld [vmem:[#allocation5 + $0xd0] sm:$0xff]
        %v1290 = vld [vmem:[#allocation5 + $0xd8] sm:$0xff]
        %v1291 = vld [vmem:[#allocation5 + $0xe0] sm:$0xff]
        %v1292 = vld [vmem:[#allocation5 + $0xe8] sm:$0xff]
        %v1293 = vld [vmem:[#allocation5 + $0xf0] sm:$0xff]
        %v1294 = vld [vmem:[#allocation5 + $0xf8] sm:$0xff]
        %v1295 = vld [vmem:[#allocation5 + $0x100] sm:$0xff]
        %v1296 = vld [vmem:[#allocation5 + $0x108] sm:$0xff]
        %v1297 = vld [vmem:[#allocation5 + $0x110] sm:$0xff]
        %v1298 = vld [vmem:[#allocation5 + $0x118] sm:$0xff]
        %v1299 = vld [vmem:[#allocation5 + $0x120] sm:$0xff]
        %v1300 = vld [vmem:[#allocation5 + $0x128] sm:$0xff]
        %v1301 = vld [vmem:[#allocation5 + $0x130] sm:$0xff]
        %v1302 = vld [vmem:[#allocation5 + $0x138] sm:$0xff]
        %v1303 = vld [vmem:[#allocation5 + $0x140] sm:$0xff]
        %v1304 = vld [vmem:[#allocation5 + $0x148] sm:$0xff]
        %v1305 = vld [vmem:[#allocation5 + $0x150] sm:$0xff]
        %v1306 = vld [vmem:[#allocation5 + $0x158] sm:$0xff]
        %v1307 = vld [vmem:[#allocation5 + $0x160] sm:$0xff]
        %v1308 = vld [vmem:[#allocation5 + $0x168] sm:$0xff]
        %v1309 = vld [vmem:[#allocation5 + $0x170] sm:$0xff]
        %v1310 = vld [vmem:[#allocation5 + $0x178] sm:$0xff]
        %v1311 = vld [vmem:[#allocation5 + $0x180] sm:$0xff]
        %v1312 = vld [vmem:[#allocation5 + $0x188] sm:$0xff]
        %v1313 = vld [vmem:[#allocation5 + $0x190] sm:$0xff]
        %v1314 = vld [vmem:[#allocation5 + $0x198] sm:$0xff]
        %v1315 = vld [vmem:[#allocation5 + $0x1a0] sm:$0xff]
        %v1316 = vld [vmem:[#allocation5 + $0x1a8] sm:$0xff]
        %v1317 = vld [vmem:[#allocation5 + $0x1b0] sm:$0xff]
        %v1318 = vld [vmem:[#allocation5 + $0x1b8] sm:$0xff]
        %v1319 = vld [vmem:[#allocation5 + $0x1c0] sm:$0xff]
        %v1320 = vld [vmem:[#allocation5 + $0x1c8] sm:$0xff]
        %v1321 = vld [vmem:[#allocation5 + $0x1d0] sm:$0xff]
        %v1322 = vld [vmem:[#allocation5 + $0x1d8] sm:$0xff]
        %v1323 = vld [vmem:[#allocation5 + $0x1e0] sm:$0xff]
        %v1324 = vld [vmem:[#allocation5 + $0x1e8] sm:$0xff]
        %v1325 = vld [vmem:[#allocation5 + $0x1f0] sm:$0xff]
        %v1326 = vld [vmem:[#allocation5 + $0x1f8] sm:$0xff]
        %v1327 = vld [vmem:[%s6] sm:$0x3]
        %v1329 = vperm.slane %v1327, 0
        %v1330 = vperm.slane %v1327, 1
        %1333 = vmatpush.msra.mxu0 %v1293
        %1334 = vmatpush.msra.mxu0 %v1291
        %1335 = vmatpush.msra.mxu0 %v1289
        %1336 = vmatpush.msra.mxu0 %v1287
        %1337 = vmatpush.msra.mxu0 %v1285
        %1338 = vmatpush.msra.mxu0 %v1283
        %1339 = vmatpush.msra.mxu0 %v1281
        %1340 = vmatpush.msra.mxu0 %v1279
        %1341 = vmatpush.msra.mxu0 %v1277
        %1342 = vmatpush.msra.mxu0 %v1275
        %1343 = vmatpush.msra.mxu0 %v1273
        %1344 = vmatpush.msra.mxu0 %v1271
        %1345 = vmatpush.msra.mxu0 %v1269
        %1346 = vmatpush.msra.mxu0 %v1267
        %1347 = vmatpush.msra.mxu0 %v1265
        %1348 = vmatpush.msra.mxu0 %v1263
        %1349 = vmatmul.f32.gmra.mxu0 %v1231
        %v1350 = vpop.f32.mrf.mxu0
        %v1351 = vadd.f32 %v1329, %v1350
        %1352 = vmatmul.f32.gmra.mxu0 %v1233
        %v1353 = vpop.f32.mrf.mxu0
        %v1354 = vadd.f32 %v1329, %v1353
        %1355 = vmatmul.f32.gmra.mxu0 %v1235
        %v1356 = vpop.f32.mrf.mxu0
        %v1357 = vadd.f32 %v1329, %v1356
        %1358 = vmatmul.f32.gmra.mxu0 %v1237
        %v1359 = vpop.f32.mrf.mxu0
        %v1360 = vadd.f32 %v1329, %v1359
        %1361 = vmatmul.f32.gmra.mxu0 %v1239
        %v1362 = vpop.f32.mrf.mxu0
        %v1363 = vadd.f32 %v1329, %v1362
        %1364 = vmatmul.f32.gmra.mxu0 %v1241
        %v1365 = vpop.f32.mrf.mxu0
        %v1366 = vadd.f32 %v1329, %v1365
        %1367 = vmatmul.f32.gmra.mxu0 %v1243
        %v1368 = vpop.f32.mrf.mxu0
        %v1369 = vadd.f32 %v1329, %v1368
        %1370 = vmatmul.f32.gmra.mxu0 %v1245
        %v1371 = vpop.f32.mrf.mxu0
        %v1372 = vadd.f32 %v1329, %v1371
        %1373 = vmatmul.f32.gmra.mxu0 %v1247
        %v1374 = vpop.f32.mrf.mxu0
        %v1375 = vadd.f32 %v1329, %v1374
        %1376 = vmatmul.f32.gmra.mxu0 %v1249
        %v1377 = vpop.f32.mrf.mxu0
        %v1378 = vadd.f32 %v1329, %v1377
        %1379 = vmatmul.f32.gmra.mxu0 %v1251
        %v1380 = vpop.f32.mrf.mxu0
        %v1381 = vadd.f32 %v1329, %v1380
        %1382 = vmatmul.f32.gmra.mxu0 %v1253
        %v1383 = vpop.f32.mrf.mxu0
        %v1384 = vadd.f32 %v1329, %v1383
        %1385 = vmatmul.f32.gmra.mxu0 %v1255
        %v1386 = vpop.f32.mrf.mxu0
        %v1387 = vadd.f32 %v1329, %v1386
        %1388 = vmatmul.f32.gmra.mxu0 %v1257
        %v1389 = vpop.f32.mrf.mxu0
        %v1390 = vadd.f32 %v1329, %v1389
        %1391 = vmatmul.f32.gmra.mxu0 %v1259
        %v1392 = vpop.f32.mrf.mxu0
        %v1393 = vadd.f32 %v1329, %v1392
        %1394 = vmatmul.f32.gmra.mxu0 %v1261
        %v1395 = vpop.f32.mrf.mxu0
        %v1396 = vadd.f32 %v1329, %v1395
        %1397 = vdwg.mxu0
        %1398 = vmatpush.msra.mxu0 %v1325
        %1399 = vmatpush.msra.mxu0 %v1323
        %1400 = vmatpush.msra.mxu0 %v1321
        %1401 = vmatpush.msra.mxu0 %v1319
        %1402 = vmatpush.msra.mxu0 %v1317
        %1403 = vmatpush.msra.mxu0 %v1315
        %1404 = vmatpush.msra.mxu0 %v1313
        %1405 = vmatpush.msra.mxu0 %v1311
        %1406 = vmatpush.msra.mxu0 %v1309
        %1407 = vmatpush.msra.mxu0 %v1307
        %1408 = vmatpush.msra.mxu0 %v1305
        %1409 = vmatpush.msra.mxu0 %v1303
        %1410 = vmatpush.msra.mxu0 %v1301
        %1411 = vmatpush.msra.mxu0 %v1299
        %1412 = vmatpush.msra.mxu0 %v1297
        %1413 = vmatpush.msra.mxu0 %v1295
        %1414 = vmatmul.f32.gmra.mxu0 %v1232
        %v1415 = vpop.f32.mrf.mxu0
        %v1416 = vadd.f32 %v1351, %v1415
        %1417 = vmatmul.f32.gmra.mxu0 %v1234
        %v1418 = vpop.f32.mrf.mxu0
        %v1419 = vadd.f32 %v1354, %v1418
        %1420 = vmatmul.f32.gmra.mxu0 %v1236
        %v1421 = vpop.f32.mrf.mxu0
        %v1422 = vadd.f32 %v1357, %v1421
        %1423 = vmatmul.f32.gmra.mxu0 %v1238
        %v1424 = vpop.f32.mrf.mxu0
        %v1425 = vadd.f32 %v1360, %v1424
        %1426 = vmatmul.f32.gmra.mxu0 %v1240
        %v1427 = vpop.f32.mrf.mxu0
        %v1428 = vadd.f32 %v1363, %v1427
        %1429 = vmatmul.f32.gmra.mxu0 %v1242
        %v1430 = vpop.f32.mrf.mxu0
        %v1431 = vadd.f32 %v1366, %v1430
        %1432 = vmatmul.f32.gmra.mxu0 %v1244
        %v1433 = vpop.f32.mrf.mxu0
        %v1434 = vadd.f32 %v1369, %v1433
        %1435 = vmatmul.f32.gmra.mxu0 %v1246
        %v1436 = vpop.f32.mrf.mxu0
        %v1437 = vadd.f32 %v1372, %v1436
        %1438 = vmatmul.f32.gmra.mxu0 %v1248
        %v1439 = vpop.f32.mrf.mxu0
        %v1440 = vadd.f32 %v1375, %v1439
        %1441 = vmatmul.f32.gmra.mxu0 %v1250
        %v1442 = vpop.f32.mrf.mxu0
        %v1443 = vadd.f32 %v1378, %v1442
        %1444 = vmatmul.f32.gmra.mxu0 %v1252
        %v1445 = vpop.f32.mrf.mxu0
        %v1446 = vadd.f32 %v1381, %v1445
        %1447 = vmatmul.f32.gmra.mxu0 %v1254
        %v1448 = vpop.f32.mrf.mxu0
        %v1449 = vadd.f32 %v1384, %v1448
        %1450 = vmatmul.f32.gmra.mxu0 %v1256
        %v1451 = vpop.f32.mrf.mxu0
        %v1452 = vadd.f32 %v1387, %v1451
        %1453 = vmatmul.f32.gmra.mxu0 %v1258
        %v1454 = vpop.f32.mrf.mxu0
        %v1455 = vadd.f32 %v1390, %v1454
        %1456 = vmatmul.f32.gmra.mxu0 %v1260
        %v1457 = vpop.f32.mrf.mxu0
        %v1458 = vadd.f32 %v1393, %v1457
        %1459 = vmatmul.f32.gmra.mxu0 %v1262
        %v1460 = vpop.f32.mrf.mxu0
        %v1461 = vadd.f32 %v1396, %v1460
        %1462 = vdwg.mxu0
        %1463 = vmatpush.msra.mxu0 %v1294
        %1464 = vmatpush.msra.mxu0 %v1292
        %1465 = vmatpush.msra.mxu0 %v1290
        %1466 = vmatpush.msra.mxu0 %v1288
        %1467 = vmatpush.msra.mxu0 %v1286
        %1468 = vmatpush.msra.mxu0 %v1284
        %1469 = vmatpush.msra.mxu0 %v1282
        %1470 = vmatpush.msra.mxu0 %v1280
        %1471 = vmatpush.msra.mxu0 %v1278
        %1472 = vmatpush.msra.mxu0 %v1276
        %1473 = vmatpush.msra.mxu0 %v1274
        %1474 = vmatpush.msra.mxu0 %v1272
        %1475 = vmatpush.msra.mxu0 %v1270
        %1476 = vmatpush.msra.mxu0 %v1268
        %1477 = vmatpush.msra.mxu0 %v1266
        %1478 = vmatpush.msra.mxu0 %v1264
        %1479 = vmatmul.f32.gmra.mxu0 %v1231
        %v1480 = vpop.f32.mrf.mxu0
        %v1481 = vadd.f32 %v1330, %v1480
        %1482 = vmatmul.f32.gmra.mxu0 %v1233
        %v1483 = vpop.f32.mrf.mxu0
        %v1484 = vadd.f32 %v1330, %v1483
        %1485 = vmatmul.f32.gmra.mxu0 %v1235
        %v1486 = vpop.f32.mrf.mxu0
        %v1487 = vadd.f32 %v1330, %v1486
        %1488 = vmatmul.f32.gmra.mxu0 %v1237
        %v1489 = vpop.f32.mrf.mxu0
        %v1490 = vadd.f32 %v1330, %v1489
        %1491 = vmatmul.f32.gmra.mxu0 %v1239
        %v1492 = vpop.f32.mrf.mxu0
        %v1493 = vadd.f32 %v1330, %v1492
        %1494 = vmatmul.f32.gmra.mxu0 %v1241
        %v1495 = vpop.f32.mrf.mxu0
        %v1496 = vadd.f32 %v1330, %v1495
        %1497 = vmatmul.f32.gmra.mxu0 %v1243
        %v1498 = vpop.f32.mrf.mxu0
        %v1499 = vadd.f32 %v1330, %v1498
        %1500 = vmatmul.f32.gmra.mxu0 %v1245
        %v1501 = vpop.f32.mrf.mxu0
        %v1502 = vadd.f32 %v1330, %v1501
        %1503 = vmatmul.f32.gmra.mxu0 %v1247
        %v1504 = vpop.f32.mrf.mxu0
        %v1505 = vadd.f32 %v1330, %v1504
        %1506 = vmatmul.f32.gmra.mxu0 %v1249
        %v1507 = vpop.f32.mrf.mxu0
        %v1508 = vadd.f32 %v1330, %v1507
        %1509 = vmatmul.f32.gmra.mxu0 %v1251
        %v1510 = vpop.f32.mrf.mxu0
        %v1511 = vadd.f32 %v1330, %v1510
        %1512 = vmatmul.f32.gmra.mxu0 %v1253
        %v1513 = vpop.f32.mrf.mxu0
        %v1514 = vadd.f32 %v1330, %v1513
        %1515 = vmatmul.f32.gmra.mxu0 %v1255
        %v1516 = vpop.f32.mrf.mxu0
        %v1517 = vadd.f32 %v1330, %v1516
        %1518 = vmatmul.f32.gmra.mxu0 %v1257
        %v1519 = vpop.f32.mrf.mxu0
        %v1520 = vadd.f32 %v1330, %v1519
        %1521 = vmatmul.f32.gmra.mxu0 %v1259
        %v1522 = vpop.f32.mrf.mxu0
        %v1523 = vadd.f32 %v1330, %v1522
        %1524 = vmatmul.f32.gmra.mxu0 %v1261
        %v1525 = vpop.f32.mrf.mxu0
        %v1526 = vadd.f32 %v1330, %v1525
        %1527 = vdwg.mxu0
        %1528 = vmatpush.msra.mxu0 %v1326
        %1529 = vmatpush.msra.mxu0 %v1324
        %1530 = vmatpush.msra.mxu0 %v1322
        %1531 = vmatpush.msra.mxu0 %v1320
        %1532 = vmatpush.msra.mxu0 %v1318
        %1533 = vmatpush.msra.mxu0 %v1316
        %1534 = vmatpush.msra.mxu0 %v1314
        %1535 = vmatpush.msra.mxu0 %v1312
        %1536 = vmatpush.msra.mxu0 %v1310
        %1537 = vmatpush.msra.mxu0 %v1308
        %1538 = vmatpush.msra.mxu0 %v1306
        %1539 = vmatpush.msra.mxu0 %v1304
        %1540 = vmatpush.msra.mxu0 %v1302
        %1541 = vmatpush.msra.mxu0 %v1300
        %1542 = vmatpush.msra.mxu0 %v1298
        %1543 = vmatpush.msra.mxu0 %v1296
        %1544 = vmatmul.f32.gmra.mxu0 %v1232
        %v1545 = vpop.f32.mrf.mxu0
        %v1546 = vadd.f32 %v1481, %v1545
        %1547 = vmatmul.f32.gmra.mxu0 %v1234
        %v1548 = vpop.f32.mrf.mxu0
        %v1549 = vadd.f32 %v1484, %v1548
        %1550 = vmatmul.f32.gmra.mxu0 %v1236
        %v1551 = vpop.f32.mrf.mxu0
        %v1552 = vadd.f32 %v1487, %v1551
        %1553 = vmatmul.f32.gmra.mxu0 %v1238
        %v1554 = vpop.f32.mrf.mxu0
        %v1555 = vadd.f32 %v1490, %v1554
        %1556 = vmatmul.f32.gmra.mxu0 %v1240
        %v1557 = vpop.f32.mrf.mxu0
        %v1558 = vadd.f32 %v1493, %v1557
        %1559 = vmatmul.f32.gmra.mxu0 %v1242
        %v1560 = vpop.f32.mrf.mxu0
        %v1561 = vadd.f32 %v1496, %v1560
        %1562 = vmatmul.f32.gmra.mxu0 %v1244
        %v1563 = vpop.f32.mrf.mxu0
        %v1564 = vadd.f32 %v1499, %v1563
        %1565 = vmatmul.f32.gmra.mxu0 %v1246
        %v1566 = vpop.f32.mrf.mxu0
        %v1567 = vadd.f32 %v1502, %v1566
        %1568 = vmatmul.f32.gmra.mxu0 %v1248
        %v1569 = vpop.f32.mrf.mxu0
        %v1570 = vadd.f32 %v1505, %v1569
        %1571 = vmatmul.f32.gmra.mxu0 %v1250
        %v1572 = vpop.f32.mrf.mxu0
        %v1573 = vadd.f32 %v1508, %v1572
        %1574 = vmatmul.f32.gmra.mxu0 %v1252
        %v1575 = vpop.f32.mrf.mxu0
        %v1576 = vadd.f32 %v1511, %v1575
        %1577 = vmatmul.f32.gmra.mxu0 %v1254
        %v1578 = vpop.f32.mrf.mxu0
        %v1579 = vadd.f32 %v1514, %v1578
        %1580 = vmatmul.f32.gmra.mxu0 %v1256
        %v1581 = vpop.f32.mrf.mxu0
        %v1582 = vadd.f32 %v1517, %v1581
        %1583 = vmatmul.f32.gmra.mxu0 %v1258
        %v1584 = vpop.f32.mrf.mxu0
        %v1585 = vadd.f32 %v1520, %v1584
        %1586 = vmatmul.f32.gmra.mxu0 %v1260
        %v1587 = vpop.f32.mrf.mxu0
        %v1588 = vadd.f32 %v1523, %v1587
        %1589 = vmatmul.f32.gmra.mxu0 %v1262
        %v1590 = vpop.f32.mrf.mxu0
        %v1591 = vadd.f32 %v1526, %v1590
        %1592 = vdwg.mxu0
        %v1593 = vmax.f32 %v1416, 0.0
        %v1594 = vmax.f32 %v1546, 0.0
        %v1595 = vmax.f32 %v1419, 0.0
        %v1596 = vmax.f32 %v1549, 0.0
        %v1597 = vmax.f32 %v1422, 0.0
        %v1598 = vmax.f32 %v1552, 0.0
        %v1599 = vmax.f32 %v1425, 0.0
        %v1600 = vmax.f32 %v1555, 0.0
        %v1601 = vmax.f32 %v1428, 0.0
        %v1602 = vmax.f32 %v1558, 0.0
        %v1603 = vmax.f32 %v1431, 0.0
        %v1604 = vmax.f32 %v1561, 0.0
        %v1605 = vmax.f32 %v1434, 0.0
        %v1606 = vmax.f32 %v1564, 0.0
        %v1607 = vmax.f32 %v1437, 0.0
        %v1608 = vmax.f32 %v1567, 0.0
        %v1609 = vmax.f32 %v1440, 0.0
        %v1610 = vmax.f32 %v1570, 0.0
        %v1611 = vmax.f32 %v1443, 0.0
        %v1612 = vmax.f32 %v1573, 0.0
        %v1613 = vmax.f32 %v1446, 0.0
        %v1614 = vmax.f32 %v1576, 0.0
        %v1615 = vmax.f32 %v1449, 0.0
        %v1616 = vmax.f32 %v1579, 0.0
        %v1617 = vmax.f32 %v1452, 0.0
        %v1618 = vmax.f32 %v1582, 0.0
        %v1619 = vmax.f32 %v1455, 0.0
        %v1620 = vmax.f32 %v1585, 0.0
        %v1621 = vmax.f32 %v1458, 0.0
        %v1622 = vmax.f32 %v1588, 0.0
        %v1623 = vmax.f32 %v1461, 0.0
        %v1624 = vmax.f32 %v1591, 0.0
        %v1625 = vld [vmem:[%s7] sm:$0xff]
        %v1626 = vld [vmem:[%s7 + $0x8] sm:$0xff]
        %v1627 = vld [vmem:[%s7 + $0x10] sm:$0xff]
        %v1628 = vld [vmem:[%s7 + $0x18] sm:$0xff]
        %v1629 = vld [vmem:[%s7 + $0x20] sm:$0xff]
        %v1630 = vld [vmem:[%s7 + $0x28] sm:$0xff]
        %v1631 = vld [vmem:[%s7 + $0x30] sm:$0xff]
        %v1632 = vld [vmem:[%s7 + $0x38] sm:$0xff]
        %v1633 = vld [vmem:[%s7 + $0x40] sm:$0xff]
        %v1634 = vld [vmem:[%s7 + $0x48] sm:$0xff]
        %v1635 = vld [vmem:[%s7 + $0x50] sm:$0xff]
        %v1636 = vld [vmem:[%s7 + $0x58] sm:$0xff]
        %v1637 = vld [vmem:[%s7 + $0x60] sm:$0xff]
        %v1638 = vld [vmem:[%s7 + $0x68] sm:$0xff]
        %v1639 = vld [vmem:[%s7 + $0x70] sm:$0xff]
        %v1640 = vld [vmem:[%s7 + $0x78] sm:$0xff]
        %v1641 = vld [vmem:[%s7 + $0x80] sm:$0xff]
        %v1642 = vld [vmem:[%s7 + $0x88] sm:$0xff]
        %v1643 = vld [vmem:[%s7 + $0x90] sm:$0xff]
        %v1644 = vld [vmem:[%s7 + $0x98] sm:$0xff]
        %v1645 = vld [vmem:[%s7 + $0xa0] sm:$0xff]
        %v1646 = vld [vmem:[%s7 + $0xa8] sm:$0xff]
        %v1647 = vld [vmem:[%s7 + $0xb0] sm:$0xff]
        %v1648 = vld [vmem:[%s7 + $0xb8] sm:$0xff]
        %v1649 = vld [vmem:[%s7 + $0xc0] sm:$0xff]
        %v1650 = vld [vmem:[%s7 + $0xc8] sm:$0xff]
        %v1651 = vld [vmem:[%s7 + $0xd0] sm:$0xff]
        %v1652 = vld [vmem:[%s7 + $0xd8] sm:$0xff]
        %v1653 = vld [vmem:[%s7 + $0xe0] sm:$0xff]
        %v1654 = vld [vmem:[%s7 + $0xe8] sm:$0xff]
        %v1655 = vld [vmem:[%s7 + $0xf0] sm:$0xff]
        %v1656 = vld [vmem:[%s7 + $0xf8] sm:$0xff]
        %v1657 = vld [vmem:[%s8] sm:$0x1]
        %v1659 = vperm.slane %v1657, 0
        %1661 = vmatpush.msra.mxu0 %v1640
        %1662 = vmatpush.msra.mxu0 %v1639
        %1663 = vmatpush.msra.mxu0 %v1638
        %1664 = vmatpush.msra.mxu0 %v1637
        %1665 = vmatpush.msra.mxu0 %v1636
        %1666 = vmatpush.msra.mxu0 %v1635
        %1667 = vmatpush.msra.mxu0 %v1634
        %1668 = vmatpush.msra.mxu0 %v1633
        %1669 = vmatpush.msra.mxu0 %v1632
        %1670 = vmatpush.msra.mxu0 %v1631
        %1671 = vmatpush.msra.mxu0 %v1630
        %1672 = vmatpush.msra.mxu0 %v1629
        %1673 = vmatpush.msra.mxu0 %v1628
        %1674 = vmatpush.msra.mxu0 %v1627
        %1675 = vmatpush.msra.mxu0 %v1626
        %1676 = vmatpush.msra.mxu0 %v1625
        %1677 = vmatmul.f32.gmra.mxu0 %v1593
        %v1678 = vpop.f32.mrf.mxu0
        %v1679 = vadd.f32 %v1659, %v1678
        %1680 = vmatmul.f32.gmra.mxu0 %v1595
        %v1681 = vpop.f32.mrf.mxu0
        %v1682 = vadd.f32 %v1659, %v1681
        %1683 = vmatmul.f32.gmra.mxu0 %v1597
        %v1684 = vpop.f32.mrf.mxu0
        %v1685 = vadd.f32 %v1659, %v1684
        %1686 = vmatmul.f32.gmra.mxu0 %v1599
        %v1687 = vpop.f32.mrf.mxu0
        %v1688 = vadd.f32 %v1659, %v1687
        %1689 = vmatmul.f32.gmra.mxu0 %v1601
        %v1690 = vpop.f32.mrf.mxu0
        %v1691 = vadd.f32 %v1659, %v1690
        %1692 = vmatmul.f32.gmra.mxu0 %v1603
        %v1693 = vpop.f32.mrf.mxu0
        %v1694 = vadd.f32 %v1659, %v1693
        %1695 = vmatmul.f32.gmra.mxu0 %v1605
        %v1696 = vpop.f32.mrf.mxu0
        %v1697 = vadd.f32 %v1659, %v1696
        %1698 = vmatmul.f32.gmra.mxu0 %v1607
        %v1699 = vpop.f32.mrf.mxu0
        %v1700 = vadd.f32 %v1659, %v1699
        %1701 = vmatmul.f32.gmra.mxu0 %v1609
        %v1702 = vpop.f32.mrf.mxu0
        %v1703 = vadd.f32 %v1659, %v1702
        %1704 = vmatmul.f32.gmra.mxu0 %v1611
        %v1705 = vpop.f32.mrf.mxu0
        %v1706 = vadd.f32 %v1659, %v1705
        %1707 = vmatmul.f32.gmra.mxu0 %v1613
        %v1708 = vpop.f32.mrf.mxu0
        %v1709 = vadd.f32 %v1659, %v1708
        %1710 = vmatmul.f32.gmra.mxu0 %v1615
        %v1711 = vpop.f32.mrf.mxu0
        %v1712 = vadd.f32 %v1659, %v1711
        %1713 = vmatmul.f32.gmra.mxu0 %v1617
        %v1714 = vpop.f32.mrf.mxu0
        %v1715 = vadd.f32 %v1659, %v1714
        %1716 = vmatmul.f32.gmra.mxu0 %v1619
        %v1717 = vpop.f32.mrf.mxu0
        %v1718 = vadd.f32 %v1659, %v1717
        %1719 = vmatmul.f32.gmra.mxu0 %v1621
        %v1720 = vpop.f32.mrf.mxu0
        %v1721 = vadd.f32 %v1659, %v1720
        %1722 = vmatmul.f32.gmra.mxu0 %v1623
        %v1723 = vpop.f32.mrf.mxu0
        %v1724 = vadd.f32 %v1659, %v1723
        %1725 = vdwg.mxu0
        %1726 = vmatpush.msra.mxu0 %v1656
        %1727 = vmatpush.msra.mxu0 %v1655
        %1728 = vmatpush.msra.mxu0 %v1654
        %1729 = vmatpush.msra.mxu0 %v1653
        %1730 = vmatpush.msra.mxu0 %v1652
        %1731 = vmatpush.msra.mxu0 %v1651
        %1732 = vmatpush.msra.mxu0 %v1650
        %1733 = vmatpush.msra.mxu0 %v1649
        %1734 = vmatpush.msra.mxu0 %v1648
        %1735 = vmatpush.msra.mxu0 %v1647
        %1736 = vmatpush.msra.mxu0 %v1646
        %1737 = vmatpush.msra.mxu0 %v1645
        %1738 = vmatpush.msra.mxu0 %v1644
        %1739 = vmatpush.msra.mxu0 %v1643
        %1740 = vmatpush.msra.mxu0 %v1642
        %1741 = vmatpush.msra.mxu0 %v1641
        %1742 = vmatmul.f32.gmra.mxu0 %v1594
        %v1743 = vpop.f32.mrf.mxu0
        %v1744 = vadd.f32 %v1679, %v1743
        %1745 = vmatmul.f32.gmra.mxu0 %v1596
        %v1746 = vpop.f32.mrf.mxu0
        %v1747 = vadd.f32 %v1682, %v1746
        %1748 = vmatmul.f32.gmra.mxu0 %v1598
        %v1749 = vpop.f32.mrf.mxu0
        %v1750 = vadd.f32 %v1685, %v1749
        %1751 = vmatmul.f32.gmra.mxu0 %v1600
        %v1752 = vpop.f32.mrf.mxu0
        %v1753 = vadd.f32 %v1688, %v1752
        %1754 = vmatmul.f32.gmra.mxu0 %v1602
        %v1755 = vpop.f32.mrf.mxu0
        %v1756 = vadd.f32 %v1691, %v1755
        %1757 = vmatmul.f32.gmra.mxu0 %v1604
        %v1758 = vpop.f32.mrf.mxu0
        %v1759 = vadd.f32 %v1694, %v1758
        %1760 = vmatmul.f32.gmra.mxu0 %v1606
        %v1761 = vpop.f32.mrf.mxu0
        %v1762 = vadd.f32 %v1697, %v1761
        %1763 = vmatmul.f32.gmra.mxu0 %v1608
        %v1764 = vpop.f32.mrf.mxu0
        %v1765 = vadd.f32 %v1700, %v1764
        %1766 = vmatmul.f32.gmra.mxu0 %v1610
        %v1767 = vpop.f32.mrf.mxu0
        %v1768 = vadd.f32 %v1703, %v1767
        %1769 = vmatmul.f32.gmra.mxu0 %v1612
        %v1770 = vpop.f32.mrf.mxu0
        %v1771 = vadd.f32 %v1706, %v1770
        %1772 = vmatmul.f32.gmra.mxu0 %v1614
        %v1773 = vpop.f32.mrf.mxu0
        %v1774 = vadd.f32 %v1709, %v1773
        %1775 = vmatmul.f32.gmra.mxu0 %v1616
        %v1776 = vpop.f32.mrf.mxu0
        %v1777 = vadd.f32 %v1712, %v1776
        %1778 = vmatmul.f32.gmra.mxu0 %v1618
        %v1779 = vpop.f32.mrf.mxu0
        %v1780 = vadd.f32 %v1715, %v1779
        %1781 = vmatmul.f32.gmra.mxu0 %v1620
        %v1782 = vpop.f32.mrf.mxu0
        %v1783 = vadd.f32 %v1718, %v1782
        %1784 = vmatmul.f32.gmra.mxu0 %v1622
        %v1785 = vpop.f32.mrf.mxu0
        %v1786 = vadd.f32 %v1721, %v1785
        %1787 = vmatmul.f32.gmra.mxu0 %v1624
        %v1788 = vpop.f32.mrf.mxu0
        %v1789 = vadd.f32 %v1724, %v1788
        %1790 = vdwg.mxu0
        %v1791 = vmax.f32 %v1744, 0.0
        %v1792 = vmax.f32 %v1747, 0.0
        %v1793 = vmax.f32 %v1750, 0.0
        %v1794 = vmax.f32 %v1753, 0.0
        %v1795 = vmax.f32 %v1756, 0.0
        %v1796 = vmax.f32 %v1759, 0.0
        %v1797 = vmax.f32 %v1762, 0.0
        %v1798 = vmax.f32 %v1765, 0.0
        %v1799 = vmax.f32 %v1768, 0.0
        %v1800 = vmax.f32 %v1771, 0.0
        %v1801 = vmax.f32 %v1774, 0.0
        %v1802 = vmax.f32 %v1777, 0.0
        %v1803 = vmax.f32 %v1780, 0.0
        %v1804 = vmax.f32 %v1783, 0.0
        %v1805 = vmax.f32 %v1786, 0.0
        %v1806 = vmax.f32 %v1789, 0.0
        %v1807 = vld [vmem:[#allocation7] sm:$0xff]
        %v1808 = vld [vmem:[#allocation7 + $0x8] sm:$0xff]
        %v1809 = vld [vmem:[#allocation7 + $0x10] sm:$0xff]
        %v1810 = vld [vmem:[#allocation7 + $0x18] sm:$0xff]
        %v1811 = vld [vmem:[#allocation7 + $0x20] sm:$0xff]
        %v1812 = vld [vmem:[#allocation7 + $0x28] sm:$0xff]
        %v1813 = vld [vmem:[#allocation7 + $0x30] sm:$0xff]
        %v1814 = vld [vmem:[#allocation7 + $0x38] sm:$0xff]
        %v1815 = vld [vmem:[#allocation7 + $0x40] sm:$0xff]
        %v1816 = vld [vmem:[#allocation7 + $0x48] sm:$0xff]
        %v1817 = vld [vmem:[#allocation7 + $0x50] sm:$0xff]
        %v1818 = vld [vmem:[#allocation7 + $0x58] sm:$0xff]
        %v1819 = vld [vmem:[#allocation7 + $0x60] sm:$0xff]
        %v1820 = vld [vmem:[#allocation7 + $0x68] sm:$0xff]
        %v1821 = vld [vmem:[#allocation7 + $0x70] sm:$0xff]
        %v1822 = vld [vmem:[#allocation7 + $0x78] sm:$0xff]
        %v1823 = vld [vmem:[#allocation8] sm:$0x1]
        %v1825 = vperm.slane %v1823, 0
        %1827 = vmatpush.msra.mxu0 %v1822
        %1828 = vmatpush.msra.mxu0 %v1821
        %1829 = vmatpush.msra.mxu0 %v1820
        %1830 = vmatpush.msra.mxu0 %v1819
        %1831 = vmatpush.msra.mxu0 %v1818
        %1832 = vmatpush.msra.mxu0 %v1817
        %1833 = vmatpush.msra.mxu0 %v1816
        %1834 = vmatpush.msra.mxu0 %v1815
        %1835 = vmatpush.msra.mxu0 %v1814
        %1836 = vmatpush.msra.mxu0 %v1813
        %1837 = vmatpush.msra.mxu0 %v1812
        %1838 = vmatpush.msra.mxu0 %v1811
        %1839 = vmatpush.msra.mxu0 %v1810
        %1840 = vmatpush.msra.mxu0 %v1809
        %1841 = vmatpush.msra.mxu0 %v1808
        %1842 = vmatpush.msra.mxu0 %v1807
        %1843 = vmatmul.f32.gmra.mxu0 %v1791
        %v1844 = vpop.f32.mrf.mxu0
        %v1845 = vadd.f32 %v1825, %v1844
        %1846 = vmatmul.f32.gmra.mxu0 %v1792
        %v1847 = vpop.f32.mrf.mxu0
        %v1848 = vadd.f32 %v1825, %v1847
        %1849 = vmatmul.f32.gmra.mxu0 %v1793
        %v1850 = vpop.f32.mrf.mxu0
        %v1851 = vadd.f32 %v1825, %v1850
        %1852 = vmatmul.f32.gmra.mxu0 %v1794
        %v1853 = vpop.f32.mrf.mxu0
        %v1854 = vadd.f32 %v1825, %v1853
        %1855 = vmatmul.f32.gmra.mxu0 %v1795
        %v1856 = vpop.f32.mrf.mxu0
        %v1857 = vadd.f32 %v1825, %v1856
        %1858 = vmatmul.f32.gmra.mxu0 %v1796
        %v1859 = vpop.f32.mrf.mxu0
        %v1860 = vadd.f32 %v1825, %v1859
        %1861 = vmatmul.f32.gmra.mxu0 %v1797
        %v1862 = vpop.f32.mrf.mxu0
        %v1863 = vadd.f32 %v1825, %v1862
        %1864 = vmatmul.f32.gmra.mxu0 %v1798
        %v1865 = vpop.f32.mrf.mxu0
        %v1866 = vadd.f32 %v1825, %v1865
        %1867 = vmatmul.f32.gmra.mxu0 %v1799
        %v1868 = vpop.f32.mrf.mxu0
        %v1869 = vadd.f32 %v1825, %v1868
        %1870 = vmatmul.f32.gmra.mxu0 %v1800
        %v1871 = vpop.f32.mrf.mxu0
        %v1872 = vadd.f32 %v1825, %v1871
        %1873 = vmatmul.f32.gmra.mxu0 %v1801
        %v1874 = vpop.f32.mrf.mxu0
        %v1875 = vadd.f32 %v1825, %v1874
        %1876 = vmatmul.f32.gmra.mxu0 %v1802
        %v1877 = vpop.f32.mrf.mxu0
        %v1878 = vadd.f32 %v1825, %v1877
        %1879 = vmatmul.f32.gmra.mxu0 %v1803
        %v1880 = vpop.f32.mrf.mxu0
        %v1881 = vadd.f32 %v1825, %v1880
        %1882 = vmatmul.f32.gmra.mxu0 %v1804
        %v1883 = vpop.f32.mrf.mxu0
        %v1884 = vadd.f32 %v1825, %v1883
        %1885 = vmatmul.f32.gmra.mxu0 %v1805
        %v1886 = vpop.f32.mrf.mxu0
        %v1887 = vadd.f32 %v1825, %v1886
        %1888 = vmatmul.f32.gmra.mxu0 %v1806
        %v1889 = vpop.f32.mrf.mxu0
        %v1890 = vadd.f32 %v1825, %v1889
        %1891 = vdwg.mxu0
        %v1892 = vmax.f32 %v1845, 0.0
        %v1893 = vmax.f32 %v1848, 0.0
        %v1894 = vmax.f32 %v1851, 0.0
        %v1895 = vmax.f32 %v1854, 0.0
        %v1896 = vmax.f32 %v1857, 0.0
        %v1897 = vmax.f32 %v1860, 0.0
        %v1898 = vmax.f32 %v1863, 0.0
        %v1899 = vmax.f32 %v1866, 0.0
        %v1900 = vmax.f32 %v1869, 0.0
        %v1901 = vmax.f32 %v1872, 0.0
        %v1902 = vmax.f32 %v1875, 0.0
        %v1903 = vmax.f32 %v1878, 0.0
        %v1904 = vmax.f32 %v1881, 0.0
        %v1905 = vmax.f32 %v1884, 0.0
        %v1906 = vmax.f32 %v1887, 0.0
        %v1907 = vmax.f32 %v1890, 0.0
        %v1908 = vld [vmem:[#allocation10] sm:$0xff]
        %v1909 = vld [vmem:[#allocation10 + $0x8] sm:$0xff]
        %v1910 = vld [vmem:[#allocation10 + $0x10] sm:$0xff]
        %v1911 = vld [vmem:[#allocation10 + $0x18] sm:$0xff]
        %v1912 = vld [vmem:[#allocation10 + $0x20] sm:$0xff]
        %v1913 = vld [vmem:[#allocation10 + $0x28] sm:$0xff]
        %v1914 = vld [vmem:[#allocation10 + $0x30] sm:$0xff]
        %v1915 = vld [vmem:[#allocation10 + $0x38] sm:$0xff]
        %v1916 = vld [vmem:[#allocation10 + $0x40] sm:$0xff]
        %v1917 = vld [vmem:[#allocation10 + $0x48] sm:$0xff]
        %v1918 = vld [vmem:[#allocation10 + $0x50] sm:$0xff]
        %v1919 = vld [vmem:[#allocation10 + $0x58] sm:$0xff]
        %v1920 = vld [vmem:[#allocation10 + $0x60] sm:$0xff]
        %v1921 = vld [vmem:[#allocation10 + $0x68] sm:$0xff]
        %v1922 = vld [vmem:[#allocation10 + $0x70] sm:$0xff]
        %v1923 = vld [vmem:[#allocation10 + $0x78] sm:$0xff]
        %v1924 = vld [vmem:[%s12] sm:$0x1]
        %v1926 = vperm.slane %v1924, 0
        %1928 = vmatpush.msra.mxu0 %v1923
        %1929 = vmatpush.msra.mxu0 %v1922
        %1930 = vmatpush.msra.mxu0 %v1921
        %1931 = vmatpush.msra.mxu0 %v1920
        %1932 = vmatpush.msra.mxu0 %v1919
        %1933 = vmatpush.msra.mxu0 %v1918
        %1934 = vmatpush.msra.mxu0 %v1917
        %1935 = vmatpush.msra.mxu0 %v1916
        %1936 = vmatpush.msra.mxu0 %v1915
        %1937 = vmatpush.msra.mxu0 %v1914
        %1938 = vmatpush.msra.mxu0 %v1913
        %1939 = vmatpush.msra.mxu0 %v1912
        %1940 = vmatpush.msra.mxu0 %v1911
        %1941 = vmatpush.msra.mxu0 %v1910
        %1942 = vmatpush.msra.mxu0 %v1909
        %1943 = vmatpush.msra.mxu0 %v1908
        %1944 = vmatmul.f32.gmra.mxu0 %v1892
        %v1945 = vpop.f32.mrf.mxu0
        %v1946 = vadd.f32 %v1926, %v1945
        %1947 = vmatmul.f32.gmra.mxu0 %v1893
        %v1948 = vpop.f32.mrf.mxu0
        %v1949 = vadd.f32 %v1926, %v1948
        %1950 = vmatmul.f32.gmra.mxu0 %v1894
        %v1951 = vpop.f32.mrf.mxu0
        %v1952 = vadd.f32 %v1926, %v1951
        %1953 = vmatmul.f32.gmra.mxu0 %v1895
        %v1954 = vpop.f32.mrf.mxu0
        %v1955 = vadd.f32 %v1926, %v1954
        %1956 = vmatmul.f32.gmra.mxu0 %v1896
        %v1957 = vpop.f32.mrf.mxu0
        %v1958 = vadd.f32 %v1926, %v1957
        %1959 = vmatmul.f32.gmra.mxu0 %v1897
        %v1960 = vpop.f32.mrf.mxu0
        %v1961 = vadd.f32 %v1926, %v1960
        %1962 = vmatmul.f32.gmra.mxu0 %v1898
        %v1963 = vpop.f32.mrf.mxu0
        %v1964 = vadd.f32 %v1926, %v1963
        %1965 = vmatmul.f32.gmra.mxu0 %v1899
        %v1966 = vpop.f32.mrf.mxu0
        %v1967 = vadd.f32 %v1926, %v1966
        %1968 = vmatmul.f32.gmra.mxu0 %v1900
        %v1969 = vpop.f32.mrf.mxu0
        %v1970 = vadd.f32 %v1926, %v1969
        %1971 = vmatmul.f32.gmra.mxu0 %v1901
        %v1972 = vpop.f32.mrf.mxu0
        %v1973 = vadd.f32 %v1926, %v1972
        %1974 = vmatmul.f32.gmra.mxu0 %v1902
        %v1975 = vpop.f32.mrf.mxu0
        %v1976 = vadd.f32 %v1926, %v1975
        %1977 = vmatmul.f32.gmra.mxu0 %v1903
        %v1978 = vpop.f32.mrf.mxu0
        %v1979 = vadd.f32 %v1926, %v1978
        %1980 = vmatmul.f32.gmra.mxu0 %v1904
        %v1981 = vpop.f32.mrf.mxu0
        %v1982 = vadd.f32 %v1926, %v1981
        %1983 = vmatmul.f32.gmra.mxu0 %v1905
        %v1984 = vpop.f32.mrf.mxu0
        %v1985 = vadd.f32 %v1926, %v1984
        %1986 = vmatmul.f32.gmra.mxu0 %v1906
        %v1987 = vpop.f32.mrf.mxu0
        %v1988 = vadd.f32 %v1926, %v1987
        %1989 = vmatmul.f32.gmra.mxu0 %v1907
        %v1990 = vpop.f32.mrf.mxu0
        %v1991 = vadd.f32 %v1926, %v1990
        %1992 = vdwg.mxu0
        %v1993 = vmax.f32 %v1946, 0.0
        %v1994 = vmax.f32 %v1949, 0.0
        %v1995 = vmax.f32 %v1952, 0.0
        %v1996 = vmax.f32 %v1955, 0.0
        %v1997 = vmax.f32 %v1958, 0.0
        %v1998 = vmax.f32 %v1961, 0.0
        %v1999 = vmax.f32 %v1964, 0.0
        %v2000 = vmax.f32 %v1967, 0.0
        %v2001 = vmax.f32 %v1970, 0.0
        %v2002 = vmax.f32 %v1973, 0.0
        %v2003 = vmax.f32 %v1976, 0.0
        %v2004 = vmax.f32 %v1979, 0.0
        %v2005 = vmax.f32 %v1982, 0.0
        %v2006 = vmax.f32 %v1985, 0.0
        %v2007 = vmax.f32 %v1988, 0.0
        %v2008 = vmax.f32 %v1991, 0.0
        %v2009 = vld [vmem:[#allocation11] sm:$0xff]
        %v2010 = vld [vmem:[#allocation11 + $0x8] sm:$0xff]
        %v2011 = vld [vmem:[#allocation11 + $0x10] sm:$0xff]
        %v2012 = vld [vmem:[#allocation11 + $0x18] sm:$0xff]
        %v2013 = vld [vmem:[#allocation11 + $0x20] sm:$0xff]
        %v2014 = vld [vmem:[#allocation11 + $0x28] sm:$0xff]
        %v2015 = vld [vmem:[#allocation11 + $0x30] sm:$0xff]
        %v2016 = vld [vmem:[#allocation11 + $0x38] sm:$0xff]
        %v2017 = vld [vmem:[#allocation11 + $0x40] sm:$0xff]
        %v2018 = vld [vmem:[#allocation11 + $0x48] sm:$0xff]
        %v2019 = vld [vmem:[#allocation11 + $0x50] sm:$0xff]
        %v2020 = vld [vmem:[#allocation11 + $0x58] sm:$0xff]
        %v2021 = vld [vmem:[#allocation11 + $0x60] sm:$0xff]
        %v2022 = vld [vmem:[#allocation11 + $0x68] sm:$0xff]
        %v2023 = vld [vmem:[#allocation11 + $0x70] sm:$0xff]
        %v2024 = vld [vmem:[#allocation11 + $0x78] sm:$0xff]
        %v2025 = vld [vmem:[%s14] sm:$0x1]
        %v2027 = vperm.slane %v2025, 0
        %2029 = vmatpush.msra.mxu0 %v2024
        %2030 = vmatpush.msra.mxu0 %v2023
        %2031 = vmatpush.msra.mxu0 %v2022
        %2032 = vmatpush.msra.mxu0 %v2021
        %2033 = vmatpush.msra.mxu0 %v2020
        %2034 = vmatpush.msra.mxu0 %v2019
        %2035 = vmatpush.msra.mxu0 %v2018
        %2036 = vmatpush.msra.mxu0 %v2017
        %2037 = vmatpush.msra.mxu0 %v2016
        %2038 = vmatpush.msra.mxu0 %v2015
        %2039 = vmatpush.msra.mxu0 %v2014
        %2040 = vmatpush.msra.mxu0 %v2013
        %2041 = vmatpush.msra.mxu0 %v2012
        %2042 = vmatpush.msra.mxu0 %v2011
        %2043 = vmatpush.msra.mxu0 %v2010
        %2044 = vmatpush.msra.mxu0 %v2009
        %2045 = vmatmul.f32.gmra.mxu0 %v1993
        %v2046 = vpop.f32.mrf.mxu0
        %v2047 = vadd.f32 %v2027, %v2046
        %2048 = vmatmul.f32.gmra.mxu0 %v1994
        %v2049 = vpop.f32.mrf.mxu0
        %v2050 = vadd.f32 %v2027, %v2049
        %2051 = vmatmul.f32.gmra.mxu0 %v1995
        %v2052 = vpop.f32.mrf.mxu0
        %v2053 = vadd.f32 %v2027, %v2052
        %2054 = vmatmul.f32.gmra.mxu0 %v1996
        %v2055 = vpop.f32.mrf.mxu0
        %v2056 = vadd.f32 %v2027, %v2055
        %2057 = vmatmul.f32.gmra.mxu0 %v1997
        %v2058 = vpop.f32.mrf.mxu0
        %v2059 = vadd.f32 %v2027, %v2058
        %2060 = vmatmul.f32.gmra.mxu0 %v1998
        %v2061 = vpop.f32.mrf.mxu0
        %v2062 = vadd.f32 %v2027, %v2061
        %2063 = vmatmul.f32.gmra.mxu0 %v1999
        %v2064 = vpop.f32.mrf.mxu0
        %v2065 = vadd.f32 %v2027, %v2064
        %2066 = vmatmul.f32.gmra.mxu0 %v2000
        %v2067 = vpop.f32.mrf.mxu0
        %v2068 = vadd.f32 %v2027, %v2067
        %2069 = vmatmul.f32.gmra.mxu0 %v2001
        %v2070 = vpop.f32.mrf.mxu0
        %v2071 = vadd.f32 %v2027, %v2070
        %2072 = vmatmul.f32.gmra.mxu0 %v2002
        %v2073 = vpop.f32.mrf.mxu0
        %v2074 = vadd.f32 %v2027, %v2073
        %2075 = vmatmul.f32.gmra.mxu0 %v2003
        %v2076 = vpop.f32.mrf.mxu0
        %v2077 = vadd.f32 %v2027, %v2076
        %2078 = vmatmul.f32.gmra.mxu0 %v2004
        %v2079 = vpop.f32.mrf.mxu0
        %v2080 = vadd.f32 %v2027, %v2079
        %2081 = vmatmul.f32.gmra.mxu0 %v2005
        %v2082 = vpop.f32.mrf.mxu0
        %v2083 = vadd.f32 %v2027, %v2082
        %2084 = vmatmul.f32.gmra.mxu0 %v2006
        %v2085 = vpop.f32.mrf.mxu0
        %v2086 = vadd.f32 %v2027, %v2085
        %2087 = vmatmul.f32.gmra.mxu0 %v2007
        %v2088 = vpop.f32.mrf.mxu0
        %v2089 = vadd.f32 %v2027, %v2088
        %2090 = vmatmul.f32.gmra.mxu0 %v2008
        %v2091 = vpop.f32.mrf.mxu0
        %v2092 = vadd.f32 %v2027, %v2091
        %2093 = vdwg.mxu0
        %v2094 = vmax.f32 %v2047, 0.0
        %v2095 = vmax.f32 %v2050, 0.0
        %v2096 = vmax.f32 %v2053, 0.0
        %v2097 = vmax.f32 %v2056, 0.0
        %v2098 = vmax.f32 %v2059, 0.0
        %v2099 = vmax.f32 %v2062, 0.0
        %v2100 = vmax.f32 %v2065, 0.0
        %v2101 = vmax.f32 %v2068, 0.0
        %v2102 = vmax.f32 %v2071, 0.0
        %v2103 = vmax.f32 %v2074, 0.0
        %v2104 = vmax.f32 %v2077, 0.0
        %v2105 = vmax.f32 %v2080, 0.0
        %v2106 = vmax.f32 %v2083, 0.0
        %v2107 = vmax.f32 %v2086, 0.0
        %v2108 = vmax.f32 %v2089, 0.0
        %v2109 = vmax.f32 %v2092, 0.0
        %v2110 = vld [vmem:[#allocation13] sm:$0xff]
        %v2111 = vld [vmem:[#allocation13 + $0x8] sm:$0xff]
        %v2112 = vld [vmem:[#allocation13 + $0x10] sm:$0xff]
        %v2113 = vld [vmem:[#allocation13 + $0x18] sm:$0xff]
        %v2114 = vld [vmem:[#allocation13 + $0x20] sm:$0xff]
        %v2115 = vld [vmem:[#allocation13 + $0x28] sm:$0xff]
        %v2116 = vld [vmem:[#allocation13 + $0x30] sm:$0xff]
        %v2117 = vld [vmem:[#allocation13 + $0x38] sm:$0xff]
        %v2118 = vld [vmem:[#allocation13 + $0x40] sm:$0xff]
        %v2119 = vld [vmem:[#allocation13 + $0x48] sm:$0xff]
        %v2120 = vld [vmem:[#allocation13 + $0x50] sm:$0xff]
        %v2121 = vld [vmem:[#allocation13 + $0x58] sm:$0xff]
        %v2122 = vld [vmem:[#allocation13 + $0x60] sm:$0xff]
        %v2123 = vld [vmem:[#allocation13 + $0x68] sm:$0xff]
        %v2124 = vld [vmem:[#allocation13 + $0x70] sm:$0xff]
        %v2125 = vld [vmem:[#allocation13 + $0x78] sm:$0xff]
        %v2126 = vld [vmem:[%s16] sm:$0x1]
        %v2128 = vperm.slane %v2126, 0
        %2130 = vmatpush.msra.mxu0 %v2125
        %2131 = vmatpush.msra.mxu0 %v2124
        %2132 = vmatpush.msra.mxu0 %v2123
        %2133 = vmatpush.msra.mxu0 %v2122
        %2134 = vmatpush.msra.mxu0 %v2121
        %2135 = vmatpush.msra.mxu0 %v2120
        %2136 = vmatpush.msra.mxu0 %v2119
        %2137 = vmatpush.msra.mxu0 %v2118
        %2138 = vmatpush.msra.mxu0 %v2117
        %2139 = vmatpush.msra.mxu0 %v2116
        %2140 = vmatpush.msra.mxu0 %v2115
        %2141 = vmatpush.msra.mxu0 %v2114
        %2142 = vmatpush.msra.mxu0 %v2113
        %2143 = vmatpush.msra.mxu0 %v2112
        %2144 = vmatpush.msra.mxu0 %v2111
        %2145 = vmatpush.msra.mxu0 %v2110
        %2146 = vmatmul.f32.gmra.mxu0 %v2094
        %v2147 = vpop.f32.mrf.mxu0
        %v2148 = vadd.f32 %v2128, %v2147
        %2149 = vmatmul.f32.gmra.mxu0 %v2095
        %v2150 = vpop.f32.mrf.mxu0
        %v2151 = vadd.f32 %v2128, %v2150
        %2152 = vmatmul.f32.gmra.mxu0 %v2096
        %v2153 = vpop.f32.mrf.mxu0
        %v2154 = vadd.f32 %v2128, %v2153
        %2155 = vmatmul.f32.gmra.mxu0 %v2097
        %v2156 = vpop.f32.mrf.mxu0
        %v2157 = vadd.f32 %v2128, %v2156
        %2158 = vmatmul.f32.gmra.mxu0 %v2098
        %v2159 = vpop.f32.mrf.mxu0
        %v2160 = vadd.f32 %v2128, %v2159
        %2161 = vmatmul.f32.gmra.mxu0 %v2099
        %v2162 = vpop.f32.mrf.mxu0
        %v2163 = vadd.f32 %v2128, %v2162
        %2164 = vmatmul.f32.gmra.mxu0 %v2100
        %v2165 = vpop.f32.mrf.mxu0
        %v2166 = vadd.f32 %v2128, %v2165
        %2167 = vmatmul.f32.gmra.mxu0 %v2101
        %v2168 = vpop.f32.mrf.mxu0
        %v2169 = vadd.f32 %v2128, %v2168
        %2170 = vmatmul.f32.gmra.mxu0 %v2102
        %v2171 = vpop.f32.mrf.mxu0
        %v2172 = vadd.f32 %v2128, %v2171
        %2173 = vmatmul.f32.gmra.mxu0 %v2103
        %v2174 = vpop.f32.mrf.mxu0
        %v2175 = vadd.f32 %v2128, %v2174
        %2176 = vmatmul.f32.gmra.mxu0 %v2104
        %v2177 = vpop.f32.mrf.mxu0
        %v2178 = vadd.f32 %v2128, %v2177
        %2179 = vmatmul.f32.gmra.mxu0 %v2105
        %v2180 = vpop.f32.mrf.mxu0
        %v2181 = vadd.f32 %v2128, %v2180
        %2182 = vmatmul.f32.gmra.mxu0 %v2106
        %v2183 = vpop.f32.mrf.mxu0
        %v2184 = vadd.f32 %v2128, %v2183
        %2185 = vmatmul.f32.gmra.mxu0 %v2107
        %v2186 = vpop.f32.mrf.mxu0
        %v2187 = vadd.f32 %v2128, %v2186
        %2188 = vmatmul.f32.gmra.mxu0 %v2108
        %v2189 = vpop.f32.mrf.mxu0
        %v2190 = vadd.f32 %v2128, %v2189
        %2191 = vmatmul.f32.gmra.mxu0 %v2109
        %v2192 = vpop.f32.mrf.mxu0
        %v2193 = vadd.f32 %v2128, %v2192
        %2194 = vdwg.mxu0
        %v2195 = vxor.u32 %v2148, 2147483648
        %v2196 = vxor.u32 %v2151, 2147483648
        %v2197 = vxor.u32 %v2154, 2147483648
        %v2198 = vxor.u32 %v2157, 2147483648
        %v2199 = vxor.u32 %v2160, 2147483648
        %v2200 = vxor.u32 %v2163, 2147483648
        %v2201 = vxor.u32 %v2166, 2147483648
        %v2202 = vxor.u32 %v2169, 2147483648
        %v2203 = vxor.u32 %v2172, 2147483648
        %v2204 = vxor.u32 %v2175, 2147483648
        %v2205 = vxor.u32 %v2178, 2147483648
        %v2206 = vxor.u32 %v2181, 2147483648
        %v2207 = vxor.u32 %v2184, 2147483648
        %v2208 = vxor.u32 %v2187, 2147483648
        %v2209 = vxor.u32 %v2190, 2147483648
        %v2210 = vxor.u32 %v2193, 2147483648
        %v2211 = vmul.f32 %v2195, 1.442695
        %v2212 = vpow.pop %v2211
        %v2213 = vmul.f32 %v2196, 1.442695
        %v2214 = vpow.pop %v2213
        %v2215 = vmul.f32 %v2197, 1.442695
        %v2216 = vpow.pop %v2215
        %v2217 = vmul.f32 %v2198, 1.442695
        %v2218 = vpow.pop %v2217
        %v2219 = vmul.f32 %v2199, 1.442695
        %v2220 = vpow.pop %v2219
        %v2221 = vmul.f32 %v2200, 1.442695
        %v2222 = vpow.pop %v2221
        %v2223 = vmul.f32 %v2201, 1.442695
        %v2224 = vpow.pop %v2223
        %v2225 = vmul.f32 %v2202, 1.442695
        %v2226 = vpow.pop %v2225
        %v2227 = vmul.f32 %v2203, 1.442695
        %v2228 = vpow.pop %v2227
        %v2229 = vmul.f32 %v2204, 1.442695
        %v2230 = vpow.pop %v2229
        %v2231 = vmul.f32 %v2205, 1.442695
        %v2232 = vpow.pop %v2231
        %v2233 = vmul.f32 %v2206, 1.442695
        %v2234 = vpow.pop %v2233
        %v2235 = vmul.f32 %v2207, 1.442695
        %v2236 = vpow.pop %v2235
        %v2237 = vmul.f32 %v2208, 1.442695
        %v2238 = vpow.pop %v2237
        %v2239 = vmul.f32 %v2209, 1.442695
        %v2240 = vpow.pop %v2239
        %v2241 = vmul.f32 %v2210, 1.442695
        %v2242 = vpow.pop %v2241
        %v2243 = vadd.f32 %v2212, 1.0
        %v2244 = vadd.f32 %v2214, 1.0
        %v2245 = vadd.f32 %v2216, 1.0
        %v2246 = vadd.f32 %v2218, 1.0
        %v2247 = vadd.f32 %v2220, 1.0
        %v2248 = vadd.f32 %v2222, 1.0
        %v2249 = vadd.f32 %v2224, 1.0
        %v2250 = vadd.f32 %v2226, 1.0
        %v2251 = vadd.f32 %v2228, 1.0
        %v2252 = vadd.f32 %v2230, 1.0
        %v2253 = vadd.f32 %v2232, 1.0
        %v2254 = vadd.f32 %v2234, 1.0
        %v2255 = vadd.f32 %v2236, 1.0
        %v2256 = vadd.f32 %v2238, 1.0
        %v2257 = vadd.f32 %v2240, 1.0
        %v2258 = vadd.f32 %v2242, 1.0
        %v2259 = vrcp.pop %v2243
        %v2260 = vmul.f32 %v2243, %v2259
        %v2261 = vsub.f32 1.0, %v2260
        %v2262 = vmul.f32 %v2259, %v2261
        %v2263 = vadd.f32 %v2259, %v2262
        %vm2264 = vweird.f32 %v2243
        %vm2265 = vweird.f32 %v2259
        %vm2266 = vmor %vm2264, %vm2265
        %v2267 = vsel %vm2266, %v2259, %v2263
        %v2268 = vand.u32 2147483647, %v2243
        %vm2269 = vcmp.eq.f32.partialorder %v2268, 8.507059e+37
        %v2270 = vand.u32 %v2243, 2147483648
        %v2271 = vor.u32 1.1754944e-38, %v2270
        %v2272 = vsel %vm2269, %v2271, %v2267
        %v2273 = vmul.f32 1.0, %v2272
        %v2274 = vrcp.pop %v2244
        %v2275 = vmul.f32 %v2244, %v2274
        %v2276 = vsub.f32 1.0, %v2275
        %v2277 = vmul.f32 %v2274, %v2276
        %v2278 = vadd.f32 %v2274, %v2277
        %vm2279 = vweird.f32 %v2244
        %vm2280 = vweird.f32 %v2274
        %vm2281 = vmor %vm2279, %vm2280
        %v2282 = vsel %vm2281, %v2274, %v2278
        %v2283 = vand.u32 2147483647, %v2244
        %vm2284 = vcmp.eq.f32.partialorder %v2283, 8.507059e+37
        %v2285 = vand.u32 %v2244, 2147483648
        %v2286 = vor.u32 1.1754944e-38, %v2285
        %v2287 = vsel %vm2284, %v2286, %v2282
        %v2288 = vmul.f32 1.0, %v2287
        %v2289 = vrcp.pop %v2245
        %v2290 = vmul.f32 %v2245, %v2289
        %v2291 = vsub.f32 1.0, %v2290
        %v2292 = vmul.f32 %v2289, %v2291
        %v2293 = vadd.f32 %v2289, %v2292
        %vm2294 = vweird.f32 %v2245
        %vm2295 = vweird.f32 %v2289
        %vm2296 = vmor %vm2294, %vm2295
        %v2297 = vsel %vm2296, %v2289, %v2293
        %v2298 = vand.u32 2147483647, %v2245
        %vm2299 = vcmp.eq.f32.partialorder %v2298, 8.507059e+37
        %v2300 = vand.u32 %v2245, 2147483648
        %v2301 = vor.u32 1.1754944e-38, %v2300
        %v2302 = vsel %vm2299, %v2301, %v2297
        %v2303 = vmul.f32 1.0, %v2302
        %v2304 = vrcp.pop %v2246
        %v2305 = vmul.f32 %v2246, %v2304
        %v2306 = vsub.f32 1.0, %v2305
        %v2307 = vmul.f32 %v2304, %v2306
        %v2308 = vadd.f32 %v2304, %v2307
        %vm2309 = vweird.f32 %v2246
        %vm2310 = vweird.f32 %v2304
        %vm2311 = vmor %vm2309, %vm2310
        %v2312 = vsel %vm2311, %v2304, %v2308
        %v2313 = vand.u32 2147483647, %v2246
        %vm2314 = vcmp.eq.f32.partialorder %v2313, 8.507059e+37
        %v2315 = vand.u32 %v2246, 2147483648
        %v2316 = vor.u32 1.1754944e-38, %v2315
        %v2317 = vsel %vm2314, %v2316, %v2312
        %v2318 = vmul.f32 1.0, %v2317
        %v2319 = vrcp.pop %v2247
        %v2320 = vmul.f32 %v2247, %v2319
        %v2321 = vsub.f32 1.0, %v2320
        %v2322 = vmul.f32 %v2319, %v2321
        %v2323 = vadd.f32 %v2319, %v2322
        %vm2324 = vweird.f32 %v2247
        %vm2325 = vweird.f32 %v2319
        %vm2326 = vmor %vm2324, %vm2325
        %v2327 = vsel %vm2326, %v2319, %v2323
        %v2328 = vand.u32 2147483647, %v2247
        %vm2329 = vcmp.eq.f32.partialorder %v2328, 8.507059e+37
        %v2330 = vand.u32 %v2247, 2147483648
        %v2331 = vor.u32 1.1754944e-38, %v2330
        %v2332 = vsel %vm2329, %v2331, %v2327
        %v2333 = vmul.f32 1.0, %v2332
        %v2334 = vrcp.pop %v2248
        %v2335 = vmul.f32 %v2248, %v2334
        %v2336 = vsub.f32 1.0, %v2335
        %v2337 = vmul.f32 %v2334, %v2336
        %v2338 = vadd.f32 %v2334, %v2337
        %vm2339 = vweird.f32 %v2248
        %vm2340 = vweird.f32 %v2334
        %vm2341 = vmor %vm2339, %vm2340
        %v2342 = vsel %vm2341, %v2334, %v2338
        %v2343 = vand.u32 2147483647, %v2248
        %vm2344 = vcmp.eq.f32.partialorder %v2343, 8.507059e+37
        %v2345 = vand.u32 %v2248, 2147483648
        %v2346 = vor.u32 1.1754944e-38, %v2345
        %v2347 = vsel %vm2344, %v2346, %v2342
        %v2348 = vmul.f32 1.0, %v2347
        %v2349 = vrcp.pop %v2249
        %v2350 = vmul.f32 %v2249, %v2349
        %v2351 = vsub.f32 1.0, %v2350
        %v2352 = vmul.f32 %v2349, %v2351
        %v2353 = vadd.f32 %v2349, %v2352
        %vm2354 = vweird.f32 %v2249
        %vm2355 = vweird.f32 %v2349
        %vm2356 = vmor %vm2354, %vm2355
        %v2357 = vsel %vm2356, %v2349, %v2353
        %v2358 = vand.u32 2147483647, %v2249
        %vm2359 = vcmp.eq.f32.partialorder %v2358, 8.507059e+37
        %v2360 = vand.u32 %v2249, 2147483648
        %v2361 = vor.u32 1.1754944e-38, %v2360
        %v2362 = vsel %vm2359, %v2361, %v2357
        %v2363 = vmul.f32 1.0, %v2362
        %v2364 = vrcp.pop %v2250
        %v2365 = vmul.f32 %v2250, %v2364
        %v2366 = vsub.f32 1.0, %v2365
        %v2367 = vmul.f32 %v2364, %v2366
        %v2368 = vadd.f32 %v2364, %v2367
        %vm2369 = vweird.f32 %v2250
        %vm2370 = vweird.f32 %v2364
        %vm2371 = vmor %vm2369, %vm2370
        %v2372 = vsel %vm2371, %v2364, %v2368
        %v2373 = vand.u32 2147483647, %v2250
        %vm2374 = vcmp.eq.f32.partialorder %v2373, 8.507059e+37
        %v2375 = vand.u32 %v2250, 2147483648
        %v2376 = vor.u32 1.1754944e-38, %v2375
        %v2377 = vsel %vm2374, %v2376, %v2372
        %v2378 = vmul.f32 1.0, %v2377
        %v2379 = vrcp.pop %v2251
        %v2380 = vmul.f32 %v2251, %v2379
        %v2381 = vsub.f32 1.0, %v2380
        %v2382 = vmul.f32 %v2379, %v2381
        %v2383 = vadd.f32 %v2379, %v2382
        %vm2384 = vweird.f32 %v2251
        %vm2385 = vweird.f32 %v2379
        %vm2386 = vmor %vm2384, %vm2385
        %v2387 = vsel %vm2386, %v2379, %v2383
        %v2388 = vand.u32 2147483647, %v2251
        %vm2389 = vcmp.eq.f32.partialorder %v2388, 8.507059e+37
        %v2390 = vand.u32 %v2251, 2147483648
        %v2391 = vor.u32 1.1754944e-38, %v2390
        %v2392 = vsel %vm2389, %v2391, %v2387
        %v2393 = vmul.f32 1.0, %v2392
        %v2394 = vrcp.pop %v2252
        %v2395 = vmul.f32 %v2252, %v2394
        %v2396 = vsub.f32 1.0, %v2395
        %v2397 = vmul.f32 %v2394, %v2396
        %v2398 = vadd.f32 %v2394, %v2397
        %vm2399 = vweird.f32 %v2252
        %vm2400 = vweird.f32 %v2394
        %vm2401 = vmor %vm2399, %vm2400
        %v2402 = vsel %vm2401, %v2394, %v2398
        %v2403 = vand.u32 2147483647, %v2252
        %vm2404 = vcmp.eq.f32.partialorder %v2403, 8.507059e+37
        %v2405 = vand.u32 %v2252, 2147483648
        %v2406 = vor.u32 1.1754944e-38, %v2405
        %v2407 = vsel %vm2404, %v2406, %v2402
        %v2408 = vmul.f32 1.0, %v2407
        %v2409 = vrcp.pop %v2253
        %v2410 = vmul.f32 %v2253, %v2409
        %v2411 = vsub.f32 1.0, %v2410
        %v2412 = vmul.f32 %v2409, %v2411
        %v2413 = vadd.f32 %v2409, %v2412
        %vm2414 = vweird.f32 %v2253
        %vm2415 = vweird.f32 %v2409
        %vm2416 = vmor %vm2414, %vm2415
        %v2417 = vsel %vm2416, %v2409, %v2413
        %v2418 = vand.u32 2147483647, %v2253
        %vm2419 = vcmp.eq.f32.partialorder %v2418, 8.507059e+37
        %v2420 = vand.u32 %v2253, 2147483648
        %v2421 = vor.u32 1.1754944e-38, %v2420
        %v2422 = vsel %vm2419, %v2421, %v2417
        %v2423 = vmul.f32 1.0, %v2422
        %v2424 = vrcp.pop %v2254
        %v2425 = vmul.f32 %v2254, %v2424
        %v2426 = vsub.f32 1.0, %v2425
        %v2427 = vmul.f32 %v2424, %v2426
        %v2428 = vadd.f32 %v2424, %v2427
        %vm2429 = vweird.f32 %v2254
        %vm2430 = vweird.f32 %v2424
        %vm2431 = vmor %vm2429, %vm2430
        %v2432 = vsel %vm2431, %v2424, %v2428
        %v2433 = vand.u32 2147483647, %v2254
        %vm2434 = vcmp.eq.f32.partialorder %v2433, 8.507059e+37
        %v2435 = vand.u32 %v2254, 2147483648
        %v2436 = vor.u32 1.1754944e-38, %v2435
        %v2437 = vsel %vm2434, %v2436, %v2432
        %v2438 = vmul.f32 1.0, %v2437
        %v2439 = vrcp.pop %v2255
        %v2440 = vmul.f32 %v2255, %v2439
        %v2441 = vsub.f32 1.0, %v2440
        %v2442 = vmul.f32 %v2439, %v2441
        %v2443 = vadd.f32 %v2439, %v2442
        %vm2444 = vweird.f32 %v2255
        %vm2445 = vweird.f32 %v2439
        %vm2446 = vmor %vm2444, %vm2445
        %v2447 = vsel %vm2446, %v2439, %v2443
        %v2448 = vand.u32 2147483647, %v2255
        %vm2449 = vcmp.eq.f32.partialorder %v2448, 8.507059e+37
        %v2450 = vand.u32 %v2255, 2147483648
        %v2451 = vor.u32 1.1754944e-38, %v2450
        %v2452 = vsel %vm2449, %v2451, %v2447
        %v2453 = vmul.f32 1.0, %v2452
        %v2454 = vrcp.pop %v2256
        %v2455 = vmul.f32 %v2256, %v2454
        %v2456 = vsub.f32 1.0, %v2455
        %v2457 = vmul.f32 %v2454, %v2456
        %v2458 = vadd.f32 %v2454, %v2457
        %vm2459 = vweird.f32 %v2256
        %vm2460 = vweird.f32 %v2454
        %vm2461 = vmor %vm2459, %vm2460
        %v2462 = vsel %vm2461, %v2454, %v2458
        %v2463 = vand.u32 2147483647, %v2256
        %vm2464 = vcmp.eq.f32.partialorder %v2463, 8.507059e+37
        %v2465 = vand.u32 %v2256, 2147483648
        %v2466 = vor.u32 1.1754944e-38, %v2465
        %v2467 = vsel %vm2464, %v2466, %v2462
        %v2468 = vmul.f32 1.0, %v2467
        %v2469 = vrcp.pop %v2257
        %v2470 = vmul.f32 %v2257, %v2469
        %v2471 = vsub.f32 1.0, %v2470
        %v2472 = vmul.f32 %v2469, %v2471
        %v2473 = vadd.f32 %v2469, %v2472
        %vm2474 = vweird.f32 %v2257
        %vm2475 = vweird.f32 %v2469
        %vm2476 = vmor %vm2474, %vm2475
        %v2477 = vsel %vm2476, %v2469, %v2473
        %v2478 = vand.u32 2147483647, %v2257
        %vm2479 = vcmp.eq.f32.partialorder %v2478, 8.507059e+37
        %v2480 = vand.u32 %v2257, 2147483648
        %v2481 = vor.u32 1.1754944e-38, %v2480
        %v2482 = vsel %vm2479, %v2481, %v2477
        %v2483 = vmul.f32 1.0, %v2482
        %v2484 = vrcp.pop %v2258
        %v2485 = vmul.f32 %v2258, %v2484
        %v2486 = vsub.f32 1.0, %v2485
        %v2487 = vmul.f32 %v2484, %v2486
        %v2488 = vadd.f32 %v2484, %v2487
        %vm2489 = vweird.f32 %v2258
        %vm2490 = vweird.f32 %v2484
        %vm2491 = vmor %vm2489, %vm2490
        %v2492 = vsel %vm2491, %v2484, %v2488
        %v2493 = vand.u32 2147483647, %v2258
        %vm2494 = vcmp.eq.f32.partialorder %v2493, 8.507059e+37
        %v2495 = vand.u32 %v2258, 2147483648
        %v2496 = vor.u32 1.1754944e-38, %v2495
        %v2497 = vsel %vm2494, %v2496, %v2492
        %v2498 = vmul.f32 1.0, %v2497
        %2499 = vst [vmem:[%s656] sm:$0xff] %v2273
        %2500 = vst [vmem:[%s656 + $0x8] sm:$0xff] %v2288
        %2501 = vst [vmem:[%s656 + $0x10] sm:$0xff] %v2303
        %2502 = vst [vmem:[%s656 + $0x18] sm:$0xff] %v2318
        %2503 = vst [vmem:[%s656 + $0x20] sm:$0xff] %v2333
        %2504 = vst [vmem:[%s656 + $0x28] sm:$0xff] %v2348
        %2505 = vst [vmem:[%s656 + $0x30] sm:$0xff] %v2363
        %2506 = vst [vmem:[%s656 + $0x38] sm:$0xff] %v2378
        %2507 = vst [vmem:[%s656 + $0x40] sm:$0xff] %v2393
        %2508 = vst [vmem:[%s656 + $0x48] sm:$0xff] %v2408
        %2509 = vst [vmem:[%s656 + $0x50] sm:$0xff] %v2423
        %2510 = vst [vmem:[%s656 + $0x58] sm:$0xff] %v2438
        %2511 = vst [vmem:[%s656 + $0x60] sm:$0xff] %v2453
        %2512 = vst [vmem:[%s656 + $0x68] sm:$0xff] %v2468
        %2513 = vst [vmem:[%s656 + $0x70] sm:$0xff] %v2483
        %2514 = vst [vmem:[%s656 + $0x78] sm:$0xff] %v2498
        %s2515 = sand.u32 %s405, 1
        %s2516 = scalar_lea.sflag [#allocation4], %s2515
        %s2517 = sand.u32 %s405, 1
        %s2518 = smul.addr %s2517, 128
        %s2519 = scalar_lea.vmem [#allocation14], %s2518
        // Predicated region
        $region117: #{tpu_custom_call.1} parent=87 // pred_check
          %p2520 = pneg %p415
        $region118: #{tpu_custom_call.1} parent=87 // pred_check_branch
          %2522 = sbr.rel (%p2520) target = $region120
        $region119: #{tpu_custom_call.1} parent=87 // pred_region
          %s2523 = smul.u32 16, %s35
          %2525 = vsyncadd %s2516, 0
          %s2526 = smul.addr %s2523, 8
          %s2527 = scalar_lea.hbm %s17, %s2526
          %s2528 = sshll.u32 %s2519, 4
          %s2529 = int_to_ptr.vmem [resolvable:$true] %s2528
          %s2530 = sshll.u32 %s2527, 4
          %s2531 = int_to_ptr.hbm [resolvable:$true] %s2530
          %2536 = dma.vmem_to_hbm [thread:$0]  %s2529, 2048, %s2531, %s2516, 128, 128, 8
        $region120: #{tpu_custom_call.1} parent=87 // pred_fallthru
          _
      $region88: #{tpu_custom_call.1} parent=5 // pred_fallthru
        _
      %p2537 = scmp.le.s32.totalorder 2, %s30
      // Predicated region
      $region121: #{tpu_custom_call.1} parent=5 // pred_check
        %p2538 = pneg %p2537
      $region122: #{tpu_custom_call.1} parent=5 // pred_check_branch
        %2540 = sbr.rel (%p2538) target = $region124
      $region123: #{tpu_custom_call.1} parent=5 // pred_region
        %s2541 = ssub.s32 %s30, 2
        // Predicated region
        $region125: #{tpu_custom_call.1} parent=123 // pred_check
          %p2542 = pneg %p421
        $region126: #{tpu_custom_call.1} parent=123 // pred_check_branch
          %2544 = sbr.rel (%p2542) target = $region128
        $region127: #{tpu_custom_call.1} parent=123 // pred_region
          %s2545 = sand.u32 %s406, 1
          %s2546 = scalar_lea.sflag [#allocation4], %s2545
          %s2547 = sand.u32 %s406, 1
          %s2548 = smul.addr %s2547, 128
          %s2549 = scalar_lea.vmem [#allocation14], %s2548
          %2551 = dma.done %s2546, 2048
        $region128: #{tpu_custom_call.1} parent=123 // pred_fallthru
          _
      $region124: #{tpu_custom_call.1} parent=5 // pred_fallthru
        _
    $region6: #{tpu_custom_call.1} parent=1 // loop_footer
      %s34 = sadd.s32 1, %s30
    $region7: #{tpu_custom_call.1} parent=1 // loop_footer_branch
      %29 = sbr.rel target = $region3
    $region8: #{tpu_custom_call.1} parent=1 // loop_exit
      _
    %2552 = vsyncpa [#allocation3], 1
    %s2553 = scalar_lea.sflag [#allocation3], 1
    %2554 = vsyncpa %s2553, 1
    %2555 = vsyncpa [#allocation6], 1
    %2556 = vsyncpa [#allocation9], 1
    %2557 = vsyncpa [#allocation12], 1
    %2558 = vsyncpa [#allocation4], 1
    %s2559 = scalar_lea.sflag [#allocation4], 1
    %2560 = vsyncpa %s2559, 1

</llo_original>
